<compile_context>
chip_gen: v6e
topology: v6e:2x2x1
jax: 0.10.0
libtpu: 0.0.40
codegen_flags: <defaults>
</compile_context>

<pallas_src>
import math

import jax
import jax.numpy as jnp
import numpy as np
from jax.experimental import pallas as pl
from jax.experimental.pallas import tpu as pltpu

# ---------------------------------------------------------------------------
# Model dims (small, deterministic)
# ---------------------------------------------------------------------------
B = 2            # batch
T = 8            # seq len
D = 32           # hidden_size
H = 4            # num_heads
HD = D // H      # head_dim = 8
# GatedFFN: hidden = 4*D = 128 -> int(2*128/3)=85 -> round up to multiple of 256
FF = 256
EPS = 1e-6
GELU_C = 0.7978845608028654  # sqrt(2/pi)


def _gelu_tanh(x):
    return 0.5 * x * (1.0 + jnp.tanh(GELU_C * (x + 0.044715 * x * x * x)))


# ---------------------------------------------------------------------------
# Pallas kernel: whole batch in one invocation
# ---------------------------------------------------------------------------
def transformer_block_kernel(
    x_ref,       # (B*T, D)    f32
    mask_ref,    # (B, T, T)   f32 additive bias
    rope_ref,    # (2, B*T, D) f32  [0]=cos, [1]=sin (head- and batch-tiled)
    norms_ref,   # (2, D)      f32  [0]=norm1.weight, [1]=norm2.weight
    wqkvr_ref,   # (D, 5*D)    bf16 [Wq | Wk | Wv | Wq@Rbd | Wk@Rbd]
    wo_ref,      # (D, D)      bf16 out_proj
    w13_ref,     # (D, 2*FF)   bf16 [W1 | W3]
    wout_ref,    # (FF, D)     bf16 FFN out_proj
    o_ref,       # (B*T, D)    f32
):
    x = x_ref[...]                       # (B*T, D) f32
    mask = mask_ref[...]                 # (B, T, T)
    cosf = rope_ref[0]                   # (B*T, D)
    sinf = rope_ref[1]

    # ---- RMSNorm 1 (f32 VPU math, as in the PyTorch module) ----
    n1 = x * jax.lax.rsqrt(jnp.mean(x * x, axis=-1, keepdims=True) + EPS)
    n1 = n1 * (1.0 + norms_ref[0:1, :])

    # ---- fused QKV + pre-rotated Q/K projection: one wide bf16 MXU matmul ----
    qkvr = jnp.dot(n1.astype(jnp.bfloat16), wqkvr_ref[...],
                   preferred_element_type=jnp.float32)          # (B*T, 5*D)

    # rope: rotation folded into the weights -> pure full-width VPU FMAs
    q = qkvr[:, 0 * D:1 * D] * cosf + qkvr[:, 3 * D:4 * D] * sinf
    k = qkvr[:, 1 * D:2 * D] * cosf + qkvr[:, 4 * D:5 * D] * sinf
    v = qkvr[:, 2 * D:3 * D]

    scale = 1.0 / math.sqrt(HD)
    wo = wo_ref[...]                                            # (D, D) bf16

    # ---- attention: static per-head loop, batch as einsum batch dim; the
    # output projection is accumulated per head (no lane-axis concatenate) ----
    attn = jnp.zeros((B * T, D), jnp.float32)
    for h in range(H):                                          # H = 4, unrolled
        lo = h * HD
        qh = q[:, lo:lo + HD].reshape(B, T, HD)
        kh = k[:, lo:lo + HD].reshape(B, T, HD)
        vh = v[:, lo:lo + HD].reshape(B, T, HD)

        s = jnp.einsum("btd,bsd->bts", qh, kh,
                       preferred_element_type=jnp.float32) * scale + mask
        s = s - jnp.max(s, axis=-1, keepdims=True)              # f32 softmax
        p = jnp.exp(s)
        p = p * pl.reciprocal(jnp.sum(p, axis=-1, keepdims=True), approx=True)
        oh = jnp.einsum("bts,bsd->btd", p, vh,
                        preferred_element_type=jnp.float32)     # (B, T, HD)
        attn = attn + jnp.dot(oh.reshape(B * T, HD).astype(jnp.bfloat16),
                              wo[lo:lo + HD, :],
                              preferred_element_type=jnp.float32)

    h1 = x + attn                                               # residual 1

    # ---- RMSNorm 2 ----
    n2 = h1 * jax.lax.rsqrt(jnp.mean(h1 * h1, axis=-1, keepdims=True) + EPS)
    n2 = n2 * (1.0 + norms_ref[1:2, :])

    # ---- Gated FFN: fused gate/up bf16 matmul, f32 gelu/gate, bf16 down-proj ----
    gu = jnp.dot(n2.astype(jnp.bfloat16), w13_ref[...],
                 preferred_element_type=jnp.float32)            # (B*T, 2*FF)
    gated = _gelu_tanh(gu[:, :FF]) * gu[:, FF:]                 # 128-aligned split
    ff = jnp.dot(gated.astype(jnp.bfloat16), wout_ref[...],
                 preferred_element_type=jnp.float32)            # (B*T, D)

    o_ref[...] = (h1 + ff).astype(o_ref.dtype)                  # residual 2


# ---------------------------------------------------------------------------
# Wrapper
# ---------------------------------------------------------------------------
def transformer_block(x, attention_mask, rotary_pe, params):
    """x: (B,T,D), attention_mask: (B,1,T,T) additive bias, rotary_pe: (1,T,HD//2,2)."""
    Bx, Tx, Dx = x.shape

    # rope cos/sin, interleave-expanded to (T, HD), then tiled to (B*T, D)
    cosf = jnp.repeat(rotary_pe[0, :, :, 0], 2, axis=-1)        # (T, HD)
    sinf = jnp.repeat(rotary_pe[0, :, :, 1], 2, axis=-1)
    rope_tab = jnp.stack(
        [jnp.tile(cosf, (Bx, H)), jnp.tile(sinf, (Bx, H))], axis=0)  # (2, B*T, D)

    # per-head pair-rotation matrix, block-diagonal over heads (D, D)
    Rm = np.zeros((HD, HD), np.float32)
    for i in range(HD // 2):
        Rm[2 * i + 1, 2 * i] = -1.0
        Rm[2 * i, 2 * i + 1] = 1.0
    Rbd = jnp.asarray(np.kron(np.eye(H, dtype=np.float32), Rm))  # (D, D)

    # fused / pre-transposed weights (PyTorch stores (out,in)); bf16 MXU operands
    wq_t = params["wq"].T
    wk_t = params["wk"].T
    wv_t = params["wv"].T
    wqkvr = jnp.concatenate(
        [wq_t, wk_t, wv_t, wq_t @ Rbd, wk_t @ Rbd], axis=1).astype(jnp.bfloat16)
    wo_t = params["wo"].T.astype(jnp.bfloat16)                   # (D, D)
    w13 = jnp.concatenate(
        [params["w1"].T, params["w3"].T], axis=1).astype(jnp.bfloat16)  # (D, 2*FF)
    wout_t = params["wout"].T.astype(jnp.bfloat16)               # (FF, D)
    norms = jnp.stack([params["norm1_w"], params["norm2_w"]], axis=0)  # (2, D)

    x2 = x.reshape(Bx * Tx, Dx)
    mask3 = attention_mask[:, 0]                                 # (B, T, T)

    def fullspec(arr):
        if arr.ndim == 2:
            return pl.BlockSpec(arr.shape, lambda i: (0, 0))
        return pl.BlockSpec(arr.shape, lambda i: (0, 0, 0))

    grid_spec = pltpu.PrefetchScalarGridSpec(
        num_scalar_prefetch=0,
        grid=(1,),                                               # single invocation
        in_specs=[
            fullspec(x2), fullspec(mask3), fullspec(rope_tab), fullspec(norms),
            fullspec(wqkvr), fullspec(wo_t), fullspec(w13), fullspec(wout_t),
        ],
        out_specs=fullspec(x2),
    )

    out2 = pl.pallas_call(
        transformer_block_kernel,
        out_shape=jax.ShapeDtypeStruct((Bx * Tx, Dx), x.dtype),
        grid_spec=grid_spec,
        compiler_params=pltpu.CompilerParams(dimension_semantics=("arbitrary",)),
    )(x2, mask3, rope_tab, norms, wqkvr, wo_t, w13, wout_t)

    return out2.reshape(Bx, Tx, Dx)


# ---------------------------------------------------------------------------
# Pure-JAX f32 reference (exact module semantics) for a correctness check
# ---------------------------------------------------------------------------
def reference_block(x, attention_mask, rotary_pe, params):
    def rms(v, w):
        return v * jax.lax.rsqrt(jnp.mean(v * v, -1, keepdims=True) + EPS) * (1.0 + w)

    cos = jnp.repeat(rotary_pe[0, :, :, 0], 2, axis=-1)          # (T, HD)
    sin = jnp.repeat(rotary_pe[0, :, :, 1], 2, axis=-1)

    def rope(t):                                                 # t: (B, H, T, HD)
        t0 = t[..., 0::2]
        t1 = t[..., 1::2]
        rotated = jnp.stack([-t1, t0], axis=-1).reshape(t.shape)
        return t * cos + rotated * sin

    n1 = rms(x, params["norm1_w"])
    q = (n1 @ params["wq"].T).reshape(B, T, H, HD).transpose(0, 2, 1, 3)
    k = (n1 @ params["wk"].T).reshape(B, T, H, HD).transpose(0, 2, 1, 3)
    v = (n1 @ params["wv"].T).reshape(B, T, H, HD).transpose(0, 2, 1, 3)
    q, k = rope(q), rope(k)
    scores = jnp.einsum("bhqd,bhkd->bhqk", q, k) / math.sqrt(HD) + attention_mask
    p = jax.nn.softmax(scores, axis=-1)
    attn = jnp.einsum("bhqk,bhkd->bhqd", p, v).transpose(0, 2, 1, 3).reshape(B, T, D)
    h1 = x + attn @ params["wo"].T
    n2 = rms(h1, params["norm2_w"])
    ff = (_gelu_tanh(n2 @ params["w1"].T) * (n2 @ params["w3"].T)) @ params["wout"].T
    return h1 + ff


# ---------------------------------------------------------------------------
if __name__ == "__main__":
    key = jax.random.PRNGKey(0)
    ks = jax.random.split(key, 12)

    params = {
        # RMSNorm weights (PyTorch inits to zeros; small randoms for a nontrivial test)
        "norm1_w": 0.1 * jax.random.normal(ks[0], (D,), jnp.float32),
        "norm2_w": 0.1 * jax.random.normal(ks[1], (D,), jnp.float32),
        # nn.Linear weights stored PyTorch-style (out_features, in_features)
        "wq": 0.05 * jax.random.normal(ks[2], (H * HD, D), jnp.float32),
        "wk": 0.05 * jax.random.normal(ks[3], (H * HD, D), jnp.float32),
        "wv": 0.05 * jax.random.normal(ks[4], (H * HD, D), jnp.float32),
        "wo": 0.05 * jax.random.normal(ks[5], (D, H * HD), jnp.float32),
        "w1": 0.05 * jax.random.normal(ks[6], (FF, D), jnp.float32),
        "w3": 0.05 * jax.random.normal(ks[7], (FF, D), jnp.float32),
        "wout": 0.05 * jax.random.normal(ks[8], (D, FF), jnp.float32),
    }

    x = jax.random.normal(ks[9], (B, T, D), jnp.float32)

    # causal additive mask (B, 1, T, T)
    causal = jnp.where(jnp.tril(jnp.ones((T, T), bool)), 0.0, -1e9).astype(jnp.float32)
    attention_mask = jnp.broadcast_to(causal, (B, 1, T, T))

    # rotary_pe: (1, T, HD//2, 2) with [..., 0]=cos, [..., 1]=sin
    pos = jnp.arange(T, dtype=jnp.float32)[:, None]
    freqs = 1.0 / (10000.0 ** (jnp.arange(0, HD, 2, dtype=jnp.float32) / HD))[None, :]
    ang = pos * freqs                                                   # (T, HD//2)
    rotary_pe = jnp.stack([jnp.cos(ang), jnp.sin(ang)], axis=-1)[None]  # (1,T,HD//2,2)

    out = transformer_block(x, attention_mask, rotary_pe, params)
    out = jax.block_until_ready(out)

    ref = reference_block(x, attention_mask, rotary_pe, params)
    assert out.shape == (B, T, D)
    # bf16 MXU operands + approx softmax reciprocal => loosened tolerance vs f32 ref
    err = float(jnp.max(jnp.abs(out - ref)))
    assert jnp.allclose(out, ref, atol=2e-2, rtol=2e-2), err

    print("KERNEL_OK")
</pallas_src>

<mosaic_0001>
module attributes {stable_mosaic.version = 11 : i64} {
  func.func @transformer_block_kernel(%arg0: i32, %arg1: memref<16x32xf32, #tpu.memory_space<vmem>>, %arg2: memref<2x8x8xf32, #tpu.memory_space<vmem>>, %arg3: memref<2x16x32xf32, #tpu.memory_space<vmem>>, %arg4: memref<2x32xf32, #tpu.memory_space<vmem>>, %arg5: memref<32x160xbf16, #tpu.memory_space<vmem>>, %arg6: memref<32x32xbf16, #tpu.memory_space<vmem>>, %arg7: memref<32x512xbf16, #tpu.memory_space<vmem>>, %arg8: memref<256x32xbf16, #tpu.memory_space<vmem>>, %arg9: memref<16x32xf32, #tpu.memory_space<vmem>>) attributes {dimension_semantics = [#tpu.dimension_semantics<arbitrary>], iteration_bounds = array<i64: 1>, scalar_prefetch = 0 : i64, scratch_operands = 0 : i64, tpu.core_type = #tpu.core_type<tc>, window_params = [{pipeline_mode = #tpu.pipeline_mode<synchronous>, transform_indices = @transform_0, window_bounds = array<i64: 16, 32>}, {pipeline_mode = #tpu.pipeline_mode<synchronous>, transform_indices = @transform_1, window_bounds = array<i64: 2, 8, 8>}, {pipeline_mode = #tpu.pipeline_mode<synchronous>, transform_indices = @transform_2, window_bounds = array<i64: 2, 16, 32>}, {pipeline_mode = #tpu.pipeline_mode<synchronous>, transform_indices = @transform_3, window_bounds = array<i64: 2, 32>}, {pipeline_mode = #tpu.pipeline_mode<synchronous>, transform_indices = @transform_4, window_bounds = array<i64: 32, 160>}, {pipeline_mode = #tpu.pipeline_mode<synchronous>, transform_indices = @transform_5, window_bounds = array<i64: 32, 32>}, {pipeline_mode = #tpu.pipeline_mode<synchronous>, transform_indices = @transform_6, window_bounds = array<i64: 32, 512>}, {pipeline_mode = #tpu.pipeline_mode<synchronous>, transform_indices = @transform_7, window_bounds = array<i64: 256, 32>}, {pipeline_mode = #tpu.pipeline_mode<synchronous>, transform_indices = @transform_8, window_bounds = array<i64: 16, 32>}]} {
    %c0 = arith.constant 0 : index
    %c0_0 = arith.constant 0 : index
    %0 = vector.load %arg1[%c0, %c0_0] : memref<16x32xf32, #tpu.memory_space<vmem>>, vector<16x32xf32>
    %c0_1 = arith.constant 0 : index
    %c0_2 = arith.constant 0 : index
    %c0_3 = arith.constant 0 : index
    %1 = vector.load %arg2[%c0_1, %c0_2, %c0_3] : memref<2x8x8xf32, #tpu.memory_space<vmem>>, vector<2x8x8xf32>
    %c0_4 = arith.constant 0 : index
    %c0_5 = arith.constant 0 : index
    %c0_6 = arith.constant 0 : index
    %2 = vector.load %arg3[%c0_4, %c0_5, %c0_6] : memref<2x16x32xf32, #tpu.memory_space<vmem>>, vector<1x16x32xf32>
    %3 = vector.shape_cast %2 : vector<1x16x32xf32> to vector<16x32xf32>
    %c1 = arith.constant 1 : index
    %c0_7 = arith.constant 0 : index
    %c0_8 = arith.constant 0 : index
    %4 = vector.load %arg3[%c1, %c0_7, %c0_8] : memref<2x16x32xf32, #tpu.memory_space<vmem>>, vector<1x16x32xf32>
    %5 = vector.shape_cast %4 : vector<1x16x32xf32> to vector<16x32xf32>
    %6 = arith.mulf %0, %0 : vector<16x32xf32>
    %cst = arith.constant dense<0.000000e+00> : vector<16xf32>
    %7 = vector.multi_reduction <add>, %6, %cst [1] : vector<16x32xf32> to vector<16xf32>
    %8 = vector.shape_cast %7 : vector<16xf32> to vector<16x1xf32>
    %cst_9 = arith.constant 3.200000e+01 : f32
    %9 = vector.broadcast %cst_9 : f32 to vector<16x1xf32>
    %10 = arith.divf %8, %9 : vector<16x1xf32>
    %cst_10 = arith.constant 9.99999997E-7 : f32
    %11 = vector.broadcast %cst_10 : f32 to vector<16x1xf32>
    %12 = arith.addf %10, %11 : vector<16x1xf32>
    %13 = math.rsqrt %12 : vector<16x1xf32>
    %14 = vector.broadcast %13 : vector<16x1xf32> to vector<16x32xf32>
    %15 = arith.mulf %0, %14 : vector<16x32xf32>
    %c0_11 = arith.constant 0 : index
    %c0_12 = arith.constant 0 : index
    %16 = vector.load %arg4[%c0_11, %c0_12] : memref<2x32xf32, #tpu.memory_space<vmem>>, vector<1x32xf32>
    %cst_13 = arith.constant 1.000000e+00 : f32
    %17 = vector.broadcast %cst_13 : f32 to vector<1x32xf32>
    %18 = arith.addf %17, %16 : vector<1x32xf32>
    %19 = vector.broadcast %18 : vector<1x32xf32> to vector<16x32xf32>
    %20 = arith.mulf %15, %19 : vector<16x32xf32>
    %21 = arith.truncf %20 : vector<16x32xf32> to vector<16x32xbf16>
    %c0_14 = arith.constant 0 : index
    %c0_15 = arith.constant 0 : index
    %22 = vector.load %arg5[%c0_14, %c0_15] : memref<32x160xbf16, #tpu.memory_space<vmem>>, vector<32x160xbf16>
    %cst_16 = arith.constant dense<0.000000e+00> : vector<16x160xf32>
    %23 = tpu.matmul %21, %22, %cst_16 {dimension_numbers = #tpu.dot_dimension_numbers<[1], [0], [0], [1], [0, 0, 1, 1], [], []>} : vector<16x32xbf16>, vector<32x160xbf16>, vector<16x160xf32> -> vector<16x160xf32>
    %24 = vector.extract_strided_slice %23 {offsets = [0, 0], sizes = [16, 32], strides = [1, 1]} : vector<16x160xf32> to vector<16x32xf32>
    %25 = arith.mulf %24, %3 : vector<16x32xf32>
    %26 = vector.extract_strided_slice %23 {offsets = [0, 96], sizes = [16, 32], strides = [1, 1]} : vector<16x160xf32> to vector<16x32xf32>
    %27 = arith.mulf %26, %5 : vector<16x32xf32>
    %28 = arith.addf %25, %27 : vector<16x32xf32>
    %29 = vector.extract_strided_slice %23 {offsets = [0, 32], sizes = [16, 32], strides = [1, 1]} : vector<16x160xf32> to vector<16x32xf32>
    %30 = arith.mulf %29, %3 : vector<16x32xf32>
    %31 = vector.extract_strided_slice %23 {offsets = [0, 128], sizes = [16, 32], strides = [1, 1]} : vector<16x160xf32> to vector<16x32xf32>
    %32 = arith.mulf %31, %5 : vector<16x32xf32>
    %33 = arith.addf %30, %32 : vector<16x32xf32>
    %34 = vector.extract_strided_slice %23 {offsets = [0, 64], sizes = [16, 32], strides = [1, 1]} : vector<16x160xf32> to vector<16x32xf32>
    %c0_17 = arith.constant 0 : index
    %c0_18 = arith.constant 0 : index
    %35 = vector.load %arg6[%c0_17, %c0_18] : memref<32x32xbf16, #tpu.memory_space<vmem>>, vector<32x32xbf16>
    %cst_19 = arith.constant 0.000000e+00 : f32
    %36 = vector.broadcast %cst_19 : f32 to vector<16x32xf32>
    %37 = vector.extract_strided_slice %28 {offsets = [0, 0], sizes = [16, 8], strides = [1, 1]} : vector<16x32xf32> to vector<16x8xf32>
    %38 = vector.shape_cast %37 : vector<16x8xf32> to vector<2x8x8xf32>
    %39 = vector.extract_strided_slice %33 {offsets = [0, 0], sizes = [16, 8], strides = [1, 1]} : vector<16x32xf32> to vector<16x8xf32>
    %40 = vector.shape_cast %39 : vector<16x8xf32> to vector<2x8x8xf32>
    %41 = vector.extract_strided_slice %34 {offsets = [0, 0], sizes = [16, 8], strides = [1, 1]} : vector<16x32xf32> to vector<16x8xf32>
    %42 = vector.shape_cast %41 : vector<16x8xf32> to vector<2x8x8xf32>
    "tpu.trace_start"() <{level = 10 : i32, message = "btd,bsd->bts"}> : () -> ()
    %cst_20 = arith.constant dense<0.000000e+00> : vector<2x8x8xf32>
    %43 = tpu.matmul %38, %40, %cst_20 {dimension_numbers = #tpu.dot_dimension_numbers<[2], [2], [1], [1], [0, 0, 0, 1, 1, 1], [0], [0]>} : vector<2x8x8xf32>, vector<2x8x8xf32>, vector<2x8x8xf32> -> vector<2x8x8xf32>
    "tpu.trace_stop"() : () -> ()
    %cst_21 = arith.constant 0.353553385 : f32
    %44 = vector.broadcast %cst_21 : f32 to vector<2x8x8xf32>
    %45 = arith.mulf %43, %44 : vector<2x8x8xf32>
    %46 = arith.addf %45, %1 : vector<2x8x8xf32>
    %cst_22 = arith.constant dense<0xFF800000> : vector<2x8xf32>
    %47 = vector.multi_reduction <maximumf>, %46, %cst_22 [2] : vector<2x8x8xf32> to vector<2x8xf32>
    %48 = vector.shape_cast %47 : vector<2x8xf32> to vector<2x8x1xf32>
    %49 = vector.broadcast %48 : vector<2x8x1xf32> to vector<2x8x8xf32>
    %50 = arith.subf %46, %49 : vector<2x8x8xf32>
    %51 = math.exp %50 : vector<2x8x8xf32>
    %cst_23 = arith.constant dense<0.000000e+00> : vector<2x8xf32>
    %52 = vector.multi_reduction <add>, %51, %cst_23 [2] : vector<2x8x8xf32> to vector<2x8xf32>
    %53 = vector.shape_cast %52 : vector<2x8xf32> to vector<2x8x1xf32>
    %54 = tpu.reciprocal %53 {approx = true} : vector<2x8x1xf32> -> vector<2x8x1xf32>
    %55 = vector.broadcast %54 : vector<2x8x1xf32> to vector<2x8x8xf32>
    %56 = arith.mulf %51, %55 : vector<2x8x8xf32>
    "tpu.trace_start"() <{level = 10 : i32, message = "bts,bsd->btd"}> : () -> ()
    %cst_24 = arith.constant dense<0.000000e+00> : vector<2x8x8xf32>
    %57 = tpu.matmul %56, %42, %cst_24 {dimension_numbers = #tpu.dot_dimension_numbers<[2], [1], [1], [2], [0, 0, 0, 1, 1, 2], [0], [0]>} : vector<2x8x8xf32>, vector<2x8x8xf32>, vector<2x8x8xf32> -> vector<2x8x8xf32>
    "tpu.trace_stop"() : () -> ()
    %58 = vector.shape_cast %57 : vector<2x8x8xf32> to vector<16x8xf32>
    %59 = arith.truncf %58 : vector<16x8xf32> to vector<16x8xbf16>
    %60 = vector.extract_strided_slice %35 {offsets = [0, 0], sizes = [8, 32], strides = [1, 1]} : vector<32x32xbf16> to vector<8x32xbf16>
    %cst_25 = arith.constant dense<0.000000e+00> : vector<16x32xf32>
    %61 = tpu.matmul %59, %60, %cst_25 {dimension_numbers = #tpu.dot_dimension_numbers<[1], [0], [0], [1], [0, 0, 1, 1], [], []>} : vector<16x8xbf16>, vector<8x32xbf16>, vector<16x32xf32> -> vector<16x32xf32>
    %62 = arith.addf %36, %61 : vector<16x32xf32>
    %63 = vector.extract_strided_slice %28 {offsets = [0, 8], sizes = [16, 8], strides = [1, 1]} : vector<16x32xf32> to vector<16x8xf32>
    %64 = vector.shape_cast %63 : vector<16x8xf32> to vector<2x8x8xf32>
    %65 = vector.extract_strided_slice %33 {offsets = [0, 8], sizes = [16, 8], strides = [1, 1]} : vector<16x32xf32> to vector<16x8xf32>
    %66 = vector.shape_cast %65 : vector<16x8xf32> to vector<2x8x8xf32>
    %67 = vector.extract_strided_slice %34 {offsets = [0, 8], sizes = [16, 8], strides = [1, 1]} : vector<16x32xf32> to vector<16x8xf32>
    %68 = vector.shape_cast %67 : vector<16x8xf32> to vector<2x8x8xf32>
    "tpu.trace_start"() <{level = 10 : i32, message = "btd,bsd->bts"}> : () -> ()
    %cst_26 = arith.constant dense<0.000000e+00> : vector<2x8x8xf32>
    %69 = tpu.matmul %64, %66, %cst_26 {dimension_numbers = #tpu.dot_dimension_numbers<[2], [2], [1], [1], [0, 0, 0, 1, 1, 1], [0], [0]>} : vector<2x8x8xf32>, vector<2x8x8xf32>, vector<2x8x8xf32> -> vector<2x8x8xf32>
    "tpu.trace_stop"() : () -> ()
    %cst_27 = arith.constant 0.353553385 : f32
    %70 = vector.broadcast %cst_27 : f32 to vector<2x8x8xf32>
    %71 = arith.mulf %69, %70 : vector<2x8x8xf32>
    %72 = arith.addf %71, %1 : vector<2x8x8xf32>
    %cst_28 = arith.constant dense<0xFF800000> : vector<2x8xf32>
    %73 = vector.multi_reduction <maximumf>, %72, %cst_28 [2] : vector<2x8x8xf32> to vector<2x8xf32>
    %74 = vector.shape_cast %73 : vector<2x8xf32> to vector<2x8x1xf32>
    %75 = vector.broadcast %74 : vector<2x8x1xf32> to vector<2x8x8xf32>
    %76 = arith.subf %72, %75 : vector<2x8x8xf32>
    %77 = math.exp %76 : vector<2x8x8xf32>
    %cst_29 = arith.constant dense<0.000000e+00> : vector<2x8xf32>
    %78 = vector.multi_reduction <add>, %77, %cst_29 [2] : vector<2x8x8xf32> to vector<2x8xf32>
    %79 = vector.shape_cast %78 : vector<2x8xf32> to vector<2x8x1xf32>
    %80 = tpu.reciprocal %79 {approx = true} : vector<2x8x1xf32> -> vector<2x8x1xf32>
    %81 = vector.broadcast %80 : vector<2x8x1xf32> to vector<2x8x8xf32>
    %82 = arith.mulf %77, %81 : vector<2x8x8xf32>
    "tpu.trace_start"() <{level = 10 : i32, message = "bts,bsd->btd"}> : () -> ()
    %cst_30 = arith.constant dense<0.000000e+00> : vector<2x8x8xf32>
    %83 = tpu.matmul %82, %68, %cst_30 {dimension_numbers = #tpu.dot_dimension_numbers<[2], [1], [1], [2], [0, 0, 0, 1, 1, 2], [0], [0]>} : vector<2x8x8xf32>, vector<2x8x8xf32>, vector<2x8x8xf32> -> vector<2x8x8xf32>
    "tpu.trace_stop"() : () -> ()
    %84 = vector.shape_cast %83 : vector<2x8x8xf32> to vector<16x8xf32>
    %85 = arith.truncf %84 : vector<16x8xf32> to vector<16x8xbf16>
    %86 = vector.extract_strided_slice %35 {offsets = [8, 0], sizes = [8, 32], strides = [1, 1]} : vector<32x32xbf16> to vector<8x32xbf16>
    %cst_31 = arith.constant dense<0.000000e+00> : vector<16x32xf32>
    %87 = tpu.matmul %85, %86, %cst_31 {dimension_numbers = #tpu.dot_dimension_numbers<[1], [0], [0], [1], [0, 0, 1, 1], [], []>} : vector<16x8xbf16>, vector<8x32xbf16>, vector<16x32xf32> -> vector<16x32xf32>
    %88 = arith.addf %62, %87 : vector<16x32xf32>
    %89 = vector.extract_strided_slice %28 {offsets = [0, 16], sizes = [16, 8], strides = [1, 1]} : vector<16x32xf32> to vector<16x8xf32>
    %90 = vector.shape_cast %89 : vector<16x8xf32> to vector<2x8x8xf32>
    %91 = vector.extract_strided_slice %33 {offsets = [0, 16], sizes = [16, 8], strides = [1, 1]} : vector<16x32xf32> to vector<16x8xf32>
    %92 = vector.shape_cast %91 : vector<16x8xf32> to vector<2x8x8xf32>
    %93 = vector.extract_strided_slice %34 {offsets = [0, 16], sizes = [16, 8], strides = [1, 1]} : vector<16x32xf32> to vector<16x8xf32>
    %94 = vector.shape_cast %93 : vector<16x8xf32> to vector<2x8x8xf32>
    "tpu.trace_start"() <{level = 10 : i32, message = "btd,bsd->bts"}> : () -> ()
    %cst_32 = arith.constant dense<0.000000e+00> : vector<2x8x8xf32>
    %95 = tpu.matmul %90, %92, %cst_32 {dimension_numbers = #tpu.dot_dimension_numbers<[2], [2], [1], [1], [0, 0, 0, 1, 1, 1], [0], [0]>} : vector<2x8x8xf32>, vector<2x8x8xf32>, vector<2x8x8xf32> -> vector<2x8x8xf32>
    "tpu.trace_stop"() : () -> ()
    %cst_33 = arith.constant 0.353553385 : f32
    %96 = vector.broadcast %cst_33 : f32 to vector<2x8x8xf32>
    %97 = arith.mulf %95, %96 : vector<2x8x8xf32>
    %98 = arith.addf %97, %1 : vector<2x8x8xf32>
    %cst_34 = arith.constant dense<0xFF800000> : vector<2x8xf32>
    %99 = vector.multi_reduction <maximumf>, %98, %cst_34 [2] : vector<2x8x8xf32> to vector<2x8xf32>
    %100 = vector.shape_cast %99 : vector<2x8xf32> to vector<2x8x1xf32>
    %101 = vector.broadcast %100 : vector<2x8x1xf32> to vector<2x8x8xf32>
    %102 = arith.subf %98, %101 : vector<2x8x8xf32>
    %103 = math.exp %102 : vector<2x8x8xf32>
    %cst_35 = arith.constant dense<0.000000e+00> : vector<2x8xf32>
    %104 = vector.multi_reduction <add>, %103, %cst_35 [2] : vector<2x8x8xf32> to vector<2x8xf32>
    %105 = vector.shape_cast %104 : vector<2x8xf32> to vector<2x8x1xf32>
    %106 = tpu.reciprocal %105 {approx = true} : vector<2x8x1xf32> -> vector<2x8x1xf32>
    %107 = vector.broadcast %106 : vector<2x8x1xf32> to vector<2x8x8xf32>
    %108 = arith.mulf %103, %107 : vector<2x8x8xf32>
    "tpu.trace_start"() <{level = 10 : i32, message = "bts,bsd->btd"}> : () -> ()
    %cst_36 = arith.constant dense<0.000000e+00> : vector<2x8x8xf32>
    %109 = tpu.matmul %108, %94, %cst_36 {dimension_numbers = #tpu.dot_dimension_numbers<[2], [1], [1], [2], [0, 0, 0, 1, 1, 2], [0], [0]>} : vector<2x8x8xf32>, vector<2x8x8xf32>, vector<2x8x8xf32> -> vector<2x8x8xf32>
    "tpu.trace_stop"() : () -> ()
    %110 = vector.shape_cast %109 : vector<2x8x8xf32> to vector<16x8xf32>
    %111 = arith.truncf %110 : vector<16x8xf32> to vector<16x8xbf16>
    %112 = vector.extract_strided_slice %35 {offsets = [16, 0], sizes = [8, 32], strides = [1, 1]} : vector<32x32xbf16> to vector<8x32xbf16>
    %cst_37 = arith.constant dense<0.000000e+00> : vector<16x32xf32>
    %113 = tpu.matmul %111, %112, %cst_37 {dimension_numbers = #tpu.dot_dimension_numbers<[1], [0], [0], [1], [0, 0, 1, 1], [], []>} : vector<16x8xbf16>, vector<8x32xbf16>, vector<16x32xf32> -> vector<16x32xf32>
    %114 = arith.addf %88, %113 : vector<16x32xf32>
    %115 = vector.extract_strided_slice %28 {offsets = [0, 24], sizes = [16, 8], strides = [1, 1]} : vector<16x32xf32> to vector<16x8xf32>
    %116 = vector.shape_cast %115 : vector<16x8xf32> to vector<2x8x8xf32>
    %117 = vector.extract_strided_slice %33 {offsets = [0, 24], sizes = [16, 8], strides = [1, 1]} : vector<16x32xf32> to vector<16x8xf32>
    %118 = vector.shape_cast %117 : vector<16x8xf32> to vector<2x8x8xf32>
    %119 = vector.extract_strided_slice %34 {offsets = [0, 24], sizes = [16, 8], strides = [1, 1]} : vector<16x32xf32> to vector<16x8xf32>
    %120 = vector.shape_cast %119 : vector<16x8xf32> to vector<2x8x8xf32>
    "tpu.trace_start"() <{level = 10 : i32, message = "btd,bsd->bts"}> : () -> ()
    %cst_38 = arith.constant dense<0.000000e+00> : vector<2x8x8xf32>
    %121 = tpu.matmul %116, %118, %cst_38 {dimension_numbers = #tpu.dot_dimension_numbers<[2], [2], [1], [1], [0, 0, 0, 1, 1, 1], [0], [0]>} : vector<2x8x8xf32>, vector<2x8x8xf32>, vector<2x8x8xf32> -> vector<2x8x8xf32>
    "tpu.trace_stop"() : () -> ()
    %cst_39 = arith.constant 0.353553385 : f32
    %122 = vector.broadcast %cst_39 : f32 to vector<2x8x8xf32>
    %123 = arith.mulf %121, %122 : vector<2x8x8xf32>
    %124 = arith.addf %123, %1 : vector<2x8x8xf32>
    %cst_40 = arith.constant dense<0xFF800000> : vector<2x8xf32>
    %125 = vector.multi_reduction <maximumf>, %124, %cst_40 [2] : vector<2x8x8xf32> to vector<2x8xf32>
    %126 = vector.shape_cast %125 : vector<2x8xf32> to vector<2x8x1xf32>
    %127 = vector.broadcast %126 : vector<2x8x1xf32> to vector<2x8x8xf32>
    %128 = arith.subf %124, %127 : vector<2x8x8xf32>
    %129 = math.exp %128 : vector<2x8x8xf32>
    %cst_41 = arith.constant dense<0.000000e+00> : vector<2x8xf32>
    %130 = vector.multi_reduction <add>, %129, %cst_41 [2] : vector<2x8x8xf32> to vector<2x8xf32>
    %131 = vector.shape_cast %130 : vector<2x8xf32> to vector<2x8x1xf32>
    %132 = tpu.reciprocal %131 {approx = true} : vector<2x8x1xf32> -> vector<2x8x1xf32>
    %133 = vector.broadcast %132 : vector<2x8x1xf32> to vector<2x8x8xf32>
    %134 = arith.mulf %129, %133 : vector<2x8x8xf32>
    "tpu.trace_start"() <{level = 10 : i32, message = "bts,bsd->btd"}> : () -> ()
    %cst_42 = arith.constant dense<0.000000e+00> : vector<2x8x8xf32>
    %135 = tpu.matmul %134, %120, %cst_42 {dimension_numbers = #tpu.dot_dimension_numbers<[2], [1], [1], [2], [0, 0, 0, 1, 1, 2], [0], [0]>} : vector<2x8x8xf32>, vector<2x8x8xf32>, vector<2x8x8xf32> -> vector<2x8x8xf32>
    "tpu.trace_stop"() : () -> ()
    %136 = vector.shape_cast %135 : vector<2x8x8xf32> to vector<16x8xf32>
    %137 = arith.truncf %136 : vector<16x8xf32> to vector<16x8xbf16>
    %138 = vector.extract_strided_slice %35 {offsets = [24, 0], sizes = [8, 32], strides = [1, 1]} : vector<32x32xbf16> to vector<8x32xbf16>
    %cst_43 = arith.constant dense<0.000000e+00> : vector<16x32xf32>
    %139 = tpu.matmul %137, %138, %cst_43 {dimension_numbers = #tpu.dot_dimension_numbers<[1], [0], [0], [1], [0, 0, 1, 1], [], []>} : vector<16x8xbf16>, vector<8x32xbf16>, vector<16x32xf32> -> vector<16x32xf32>
    %140 = arith.addf %114, %139 : vector<16x32xf32>
    %141 = arith.addf %0, %140 : vector<16x32xf32>
    %142 = arith.mulf %141, %141 : vector<16x32xf32>
    %cst_44 = arith.constant dense<0.000000e+00> : vector<16xf32>
    %143 = vector.multi_reduction <add>, %142, %cst_44 [1] : vector<16x32xf32> to vector<16xf32>
    %144 = vector.shape_cast %143 : vector<16xf32> to vector<16x1xf32>
    %cst_45 = arith.constant 3.200000e+01 : f32
    %145 = vector.broadcast %cst_45 : f32 to vector<16x1xf32>
    %146 = arith.divf %144, %145 : vector<16x1xf32>
    %cst_46 = arith.constant 9.99999997E-7 : f32
    %147 = vector.broadcast %cst_46 : f32 to vector<16x1xf32>
    %148 = arith.addf %146, %147 : vector<16x1xf32>
    %149 = math.rsqrt %148 : vector<16x1xf32>
    %150 = vector.broadcast %149 : vector<16x1xf32> to vector<16x32xf32>
    %151 = arith.mulf %141, %150 : vector<16x32xf32>
    %c1_47 = arith.constant 1 : index
    %c0_48 = arith.constant 0 : index
    %152 = vector.load %arg4[%c1_47, %c0_48] : memref<2x32xf32, #tpu.memory_space<vmem>>, vector<1x32xf32>
    %cst_49 = arith.constant 1.000000e+00 : f32
    %153 = vector.broadcast %cst_49 : f32 to vector<1x32xf32>
    %154 = arith.addf %153, %152 : vector<1x32xf32>
    %155 = vector.broadcast %154 : vector<1x32xf32> to vector<16x32xf32>
    %156 = arith.mulf %151, %155 : vector<16x32xf32>
    %157 = arith.truncf %156 : vector<16x32xf32> to vector<16x32xbf16>
    %c0_50 = arith.constant 0 : index
    %c0_51 = arith.constant 0 : index
    %158 = vector.load %arg7[%c0_50, %c0_51] : memref<32x512xbf16, #tpu.memory_space<vmem>>, vector<32x512xbf16>
    %cst_52 = arith.constant dense<0.000000e+00> : vector<16x512xf32>
    %159 = tpu.matmul %157, %158, %cst_52 {dimension_numbers = #tpu.dot_dimension_numbers<[1], [0], [0], [1], [0, 0, 1, 1], [], []>} : vector<16x32xbf16>, vector<32x512xbf16>, vector<16x512xf32> -> vector<16x512xf32>
    %160 = vector.extract_strided_slice %159 {offsets = [0, 0], sizes = [16, 256], strides = [1, 1]} : vector<16x512xf32> to vector<16x256xf32>
    %cst_53 = arith.constant 5.000000e-01 : f32
    %161 = vector.broadcast %cst_53 : f32 to vector<16x256xf32>
    %162 = arith.mulf %161, %160 : vector<16x256xf32>
    %cst_54 = arith.constant 4.471500e-02 : f32
    %163 = vector.broadcast %cst_54 : f32 to vector<16x256xf32>
    %164 = arith.mulf %163, %160 : vector<16x256xf32>
    %165 = arith.mulf %164, %160 : vector<16x256xf32>
    %166 = arith.mulf %165, %160 : vector<16x256xf32>
    %167 = arith.addf %160, %166 : vector<16x256xf32>
    %cst_55 = arith.constant 0.797884583 : f32
    %168 = vector.broadcast %cst_55 : f32 to vector<16x256xf32>
    %169 = arith.mulf %168, %167 : vector<16x256xf32>
    %170 = math.tanh %169 : vector<16x256xf32>
    %cst_56 = arith.constant 1.000000e+00 : f32
    %171 = vector.broadcast %cst_56 : f32 to vector<16x256xf32>
    %172 = arith.addf %171, %170 : vector<16x256xf32>
    %173 = arith.mulf %162, %172 : vector<16x256xf32>
    %174 = vector.extract_strided_slice %159 {offsets = [0, 256], sizes = [16, 256], strides = [1, 1]} : vector<16x512xf32> to vector<16x256xf32>
    %175 = arith.mulf %173, %174 : vector<16x256xf32>
    %176 = arith.truncf %175 : vector<16x256xf32> to vector<16x256xbf16>
    %c0_57 = arith.constant 0 : index
    %c0_58 = arith.constant 0 : index
    %177 = vector.load %arg8[%c0_57, %c0_58] : memref<256x32xbf16, #tpu.memory_space<vmem>>, vector<256x32xbf16>
    %cst_59 = arith.constant dense<0.000000e+00> : vector<16x32xf32>
    %178 = tpu.matmul %176, %177, %cst_59 {dimension_numbers = #tpu.dot_dimension_numbers<[1], [0], [0], [1], [0, 0, 1, 1], [], []>} : vector<16x256xbf16>, vector<256x32xbf16>, vector<16x32xf32> -> vector<16x32xf32>
    %179 = arith.addf %141, %178 : vector<16x32xf32>
    %c0_60 = arith.constant 0 : index
    %c0_61 = arith.constant 0 : index
    %180 = vector.load %arg9[%c0_60, %c0_61] : memref<16x32xf32, #tpu.memory_space<vmem>>, vector<16x32xf32>
    tpu.vector_store %arg9[%c0_60, %c0_61], %179 {strides = array<i32>} : memref<16x32xf32, #tpu.memory_space<vmem>>, vector<16x32xf32>,
    return
  }
  func.func @transform_0(%arg0: i32) -> (i32, i32) {
    %c0_i32 = arith.constant 0 : i32
    %c0_i32_0 = arith.constant 0 : i32
    %c0_i32_1 = arith.constant 0 : i32
    return %c0_i32, %c0_i32_0 : i32, i32
  }
  func.func @transform_1(%arg0: i32) -> (i32, i32, i32) {
    %c0_i32 = arith.constant 0 : i32
    %c0_i32_0 = arith.constant 0 : i32
    %c0_i32_1 = arith.constant 0 : i32
    %c0_i32_2 = arith.constant 0 : i32
    return %c0_i32, %c0_i32_0, %c0_i32_1 : i32, i32, i32
  }
  func.func @transform_2(%arg0: i32) -> (i32, i32, i32) {
    %c0_i32 = arith.constant 0 : i32
    %c0_i32_0 = arith.constant 0 : i32
    %c0_i32_1 = arith.constant 0 : i32
    %c0_i32_2 = arith.constant 0 : i32
    return %c0_i32, %c0_i32_0, %c0_i32_1 : i32, i32, i32
  }
  func.func @transform_3(%arg0: i32) -> (i32, i32) {
    %c0_i32 = arith.constant 0 : i32
    %c0_i32_0 = arith.constant 0 : i32
    %c0_i32_1 = arith.constant 0 : i32
    return %c0_i32, %c0_i32_0 : i32, i32
  }
  func.func @transform_4(%arg0: i32) -> (i32, i32) {
    %c0_i32 = arith.constant 0 : i32
    %c0_i32_0 = arith.constant 0 : i32
    %c0_i32_1 = arith.constant 0 : i32
    return %c0_i32, %c0_i32_0 : i32, i32
  }
  func.func @transform_5(%arg0: i32) -> (i32, i32) {
    %c0_i32 = arith.constant 0 : i32
    %c0_i32_0 = arith.constant 0 : i32
    %c0_i32_1 = arith.constant 0 : i32
    return %c0_i32, %c0_i32_0 : i32, i32
  }
  func.func @transform_6(%arg0: i32) -> (i32, i32) {
    %c0_i32 = arith.constant 0 : i32
    %c0_i32_0 = arith.constant 0 : i32
    %c0_i32_1 = arith.constant 0 : i32
    return %c0_i32, %c0_i32_0 : i32, i32
  }
  func.func @transform_7(%arg0: i32) -> (i32, i32) {
    %c0_i32 = arith.constant 0 : i32
    %c0_i32_0 = arith.constant 0 : i32
    %c0_i32_1 = arith.constant 0 : i32
    return %c0_i32, %c0_i32_0 : i32, i32
  }
  func.func @transform_8(%arg0: i32) -> (i32, i32) {
    %c0_i32 = arith.constant 0 : i32
    %c0_i32_0 = arith.constant 0 : i32
    %c0_i32_1 = arith.constant 0 : i32
    return %c0_i32, %c0_i32_0 : i32, i32
  }
}

</mosaic_0001>

<llo_original>
// kernel: tpu_custom_call.1
$region0: #{tpu_custom_call.1}
  #allocation0 [shape = 'u32[]', space=smem, size = 0x4, offset = 0x4, fixed_abs, tag = 'smem constant byte address 0x4 - core index']
  #allocation1 [shape = 'u32[144,128]{1,0:T(1,128)}', space=vmem, size = 0x12000, scoped, tag = 'internal scratch']
  %s0 = inlined_call_operand.vmem [shape: f32[16,32], index: 0, kind: input, shape index: {}]
  %s1 = inlined_call_operand.vmem [shape: f32[2,8,8], index: 1, kind: input, shape index: {}]
  %s2 = inlined_call_operand.vmem [shape: f32[2,16,32], index: 2, kind: input, shape index: {}]
  %s3 = inlined_call_operand.vmem [shape: f32[2,32], index: 3, kind: input, shape index: {}]
  %s4 = inlined_call_operand.vmem [shape: bf16[32,160], index: 4, kind: input, shape index: {}]
  %s5 = inlined_call_operand.hbm [shape: bf16[32,32], index: 5, kind: input, shape index: {}]
  %s6 = inlined_call_operand.vmem [shape: bf16[32,512], index: 6, kind: input, shape index: {}]
  %s7 = inlined_call_operand.vmem [shape: bf16[256,32], index: 7, kind: input, shape index: {}]
  %s8 = inlined_call_operand.hbm [shape: f32[16,32], index: 8, kind: output, shape index: {}]
  %s9 = sld [smem:[#allocation0]]
  $region46: #{tpu_custom_call.1} parent=0
    _
  %s11 = ssub.s32 1, %s9
  %s12 = scalar_select 0, %s11, %s9
  $region1: #{tpu_custom_call.1} parent=0
    #allocation2 [shape = 'u8[8192]{0}', space=vmem, size = 0x2000, scoped, tag = 'input window, operand 5, single buffered']
    #allocation3 [shape = 's32[1]{0}', space=sflag, size = 0x4, scoped, tag = 'scoped memory for tpu_custom_call.1']
    #allocation4 [shape = 's32[1]{0}', space=sflag, size = 0x4, scoped, tag = 'scoped memory for tpu_custom_call.1']
    #allocation5 [shape = 'u8[8192]{0}', space=vmem, size = 0x2000, scoped, tag = 'output window, operand 0, single buffered']
    %13 = vsyncpa [#allocation3], 0
    %14 = vsyncpa [#allocation4], 0
    // Predicated region
    $region2: #{tpu_custom_call.1} parent=1 // pred_check
      _
    $region3: #{tpu_custom_call.1} parent=1 // pred_check_branch
      %16 = sbr.rel (0) target = $region5
    $region4: #{tpu_custom_call.1} parent=1 // pred_region
      _
    $region5: #{tpu_custom_call.1} parent=1 // pred_fallthru
      _
    // Predicated region
    $region6: #{tpu_custom_call.1} parent=1 // pred_check
      _
    $region7: #{tpu_custom_call.1} parent=1 // pred_check_branch
      %18 = sbr.rel (0) target = $region9
    $region8: #{tpu_custom_call.1} parent=1 // pred_region
      _
    $region9: #{tpu_custom_call.1} parent=1 // pred_fallthru
      _
    // Predicated region
    $region10: #{tpu_custom_call.1} parent=1 // pred_check
      _
    $region11: #{tpu_custom_call.1} parent=1 // pred_check_branch
      %20 = sbr.rel (0) target = $region13
    $region12: #{tpu_custom_call.1} parent=1 // pred_region
      _
    $region13: #{tpu_custom_call.1} parent=1 // pred_fallthru
      _
    // Predicated region
    $region14: #{tpu_custom_call.1} parent=1 // pred_check
      _
    $region15: #{tpu_custom_call.1} parent=1 // pred_check_branch
      %22 = sbr.rel (0) target = $region17
    $region16: #{tpu_custom_call.1} parent=1 // pred_region
      _
    $region17: #{tpu_custom_call.1} parent=1 // pred_fallthru
      _
    // Predicated region
    $region18: #{tpu_custom_call.1} parent=1 // pred_check
      _
    $region19: #{tpu_custom_call.1} parent=1 // pred_check_branch
      %24 = sbr.rel (0) target = $region21
    $region20: #{tpu_custom_call.1} parent=1 // pred_region
      _
    $region21: #{tpu_custom_call.1} parent=1 // pred_fallthru
      _
    // Predicated region
    $region22: #{tpu_custom_call.1} parent=1 // pred_check
      _
    $region23: #{tpu_custom_call.1} parent=1 // pred_check_branch
      %26 = sbr.rel (0) target = $region25
    $region24: #{tpu_custom_call.1} parent=1 // pred_region
      %s28 = ssub.s32 256, 256
      %29 = vsyncadd [#allocation3], %s28
      %s30 = sshll.u32 [#allocation2], 4
      %s31 = int_to_ptr.vmem [resolvable:$true] %s30
      %36 = dma.hbm_to_vmem [thread:$0]  %s5, 256, %s31, [#allocation3], 64, 64, 4
    $region25: #{tpu_custom_call.1} parent=1 // pred_fallthru
      _
    // Predicated region
    $region26: #{tpu_custom_call.1} parent=1 // pred_check
      _
    $region27: #{tpu_custom_call.1} parent=1 // pred_check_branch
      %38 = sbr.rel (0) target = $region29
    $region28: #{tpu_custom_call.1} parent=1 // pred_region
      _
    $region29: #{tpu_custom_call.1} parent=1 // pred_fallthru
      _
    // Predicated region
    $region30: #{tpu_custom_call.1} parent=1 // pred_check
      _
    $region31: #{tpu_custom_call.1} parent=1 // pred_check_branch
      %40 = sbr.rel (0) target = $region33
    $region32: #{tpu_custom_call.1} parent=1 // pred_region
      _
    $region33: #{tpu_custom_call.1} parent=1 // pred_fallthru
      _
    // Predicated region
    $region34: #{tpu_custom_call.1} parent=1 // pred_check
      _
    $region35: #{tpu_custom_call.1} parent=1 // pred_check_branch
      %42 = sbr.rel (0) target = $region37
    $region36: #{tpu_custom_call.1} parent=1 // pred_region
      %43 = dma.done [#allocation3], 256
    $region37: #{tpu_custom_call.1} parent=1 // pred_fallthru
      _
    %v45 = vld [vmem:[%s0] sm:$0xff]
    %v46 = vld [vmem:[%s0 + $0x8] sm:$0xff]
    %v47 = vld [vmem:[%s1] sm:$0xff]
    %v48 = vld [vmem:[%s1 + $0x8] sm:$0xff]
    %v49 = vld [vmem:[%s2] sm:$0xff]
    %v50 = vld [vmem:[%s2 + $0x8] sm:$0xff]
    %s51 = scalar_lea.vmem %s2, 16
    %v52 = vld [vmem:[%s51] sm:$0xff]
    %v53 = vld [vmem:[%s51 + $0x8] sm:$0xff]
    %v54 = vmul.f32 %v45, %v45
    %v55 = vmul.f32 %v46, %v46
    %vm56 = vcmask 261120
    %v57 = vsel %vm56, %v54, 0.0
    %58 = vadd.xlane.f32.xlu0 %v57
    %v59 = vpop.xlane.xlu0 %58
    %v60 = vsel %vm56, %v55, 0.0
    %61 = vadd.xlane.f32.xlu0 %v60
    %v62 = vpop.xlane.xlu0 %61
    %v63 = vrcp.pop 32.0
    %v64 = vmul.f32 %v59, %v63
    %v65 = vmul.f32 %v62, %v63
    %v66 = vadd.f32 %v64, 1e-06
    %v67 = vadd.f32 %v65, 1e-06
    %v68 = vrsqrt.pop %v66
    %v69 = vrsqrt.pop %v67
    %v70 = vmul.f32 %v45, %v68
    %v71 = vmul.f32 %v46, %v69
    %v72 = vld [vmem:[%s3] sm:$0x1]
    %v73 = vadd.f32 %v72, 1.0
    %v74 = vlaneseq
    %v75 = vshrl.u32 %v74, 7
    %v76 = vsub.s32 0, %v75
    %v77 = vrot.slane %v73, %v76
    %v78 = vmul.f32 %v70, %v77
    %v79 = vmul.f32 %v71, %v77
    %v80 = vpack.c.bf16 %v79, %v78
    %v81 = vld [vmem:[%s4] sm:$0xff]
    %v82 = vld [vmem:[%s4 + $0x8] sm:$0xff]
    %v83 = vld [vmem:[%s4 + $0x10] sm:$0xff]
    %v84 = vld [vmem:[%s4 + $0x18] sm:$0xff]
    %v89 = vunpack.c.l.b16 %v81
    %v90 = vunpack.c.h.b16 %v81
    %v91 = vunpack.c.l.b16 %v82
    %v92 = vunpack.c.h.b16 %v82
    %v93 = vunpack.c.l.b16 %v83
    %v94 = vunpack.c.h.b16 %v83
    %v95 = vunpack.c.l.b16 %v84
    %v96 = vunpack.c.h.b16 %v84
    %v97 = vpack.c.b16 %v91, %v89
    %v98 = vpack.c.b16 %v92, %v90
    %v99 = vpack.c.b16 %v95, %v93
    %v100 = vpack.c.b16 %v96, %v94
    %v106 = vsel %vm56, %v80, 0
    %108 = vmatprep.subr.bf16.mxu0 0
    %109 = vmatpush1.bf16.msra.mxu0 0
    %110 = vmatprep.subr.bf16.mxu0 0
    %111 = vmatpush1.bf16.msra.mxu0 0
    %112 = vmatprep.subr.bf16.mxu0 0
    %113 = vmatpush1.bf16.msra.mxu0 0
    %114 = vmatprep.subr.bf16.mxu0 0
    %115 = vmatpush1.bf16.msra.mxu0 0
    %116 = vmatprep.subr.bf16.mxu0 0
    %117 = vmatpush1.bf16.msra.mxu0 0
    %118 = vmatprep.subr.bf16.mxu0 0
    %119 = vmatpush1.bf16.msra.mxu0 0
    %120 = vmatprep.subr.bf16.mxu0 %v100
    %121 = vmatpush1.bf16.msra.mxu0 %v99
    %122 = vmatprep.subr.bf16.mxu0 %v98
    %123 = vmatpush1.bf16.msra.mxu0 %v97
    %124 = vmatprep.subr.bf16.mxu0 0
    %125 = vmatpush2.bf16.msra.mxu0 0
    %126 = vmatprep.subr.bf16.mxu0 0
    %127 = vmatpush2.bf16.msra.mxu0 0
    %128 = vmatprep.subr.bf16.mxu0 0
    %129 = vmatpush2.bf16.msra.mxu0 0
    %130 = vmatprep.subr.bf16.mxu0 0
    %131 = vmatpush2.bf16.msra.mxu0 0
    %132 = vmatprep.subr.bf16.mxu0 0
    %133 = vmatpush2.bf16.msra.mxu0 0
    %134 = vmatprep.subr.bf16.mxu0 0
    %135 = vmatpush2.bf16.msra.mxu0 0
    %136 = vmatprep.subr.bf16.mxu0 0
    %137 = vmatpush2.bf16.msra.mxu0 0
    %138 = vmatprep.subr.bf16.mxu0 0
    %139 = vmatpush2.bf16.msra.mxu0 0
    %140 = vmatprep.mubr.bf16.mxu0 0
    %141 = vmatmul.mubr.bf16.gmra.mxu0 %v106
    %v142 = vpop.f32.mrf.mxu0
    %v143 = vadd.f32 0.0, %v142
    %v144 = vpop.f32.mrf.mxu0
    %v145 = vadd.f32 0.0, %v144
    %v146 = vpop.f32.mrf.mxu0
    %v147 = vadd.f32 0.0, %v146
    %v148 = vpop.f32.mrf.mxu0
    %v149 = vadd.f32 0.0, %v148
    %150 = vdwg.mxu0
    %v151 = vmul.f32 %v143, %v49
    %v152 = vmul.f32 %v147, %v50
    %155 = vrot.lane.b32.xlu0 %v52, 96
    %v156 = vpop.permute.xlu0 %155
    %157 = vrot.lane.b32.xlu0 %v53, 96
    %v158 = vpop.permute.xlu0 %157
    %v161 = vmul.f32 %v143, %v156
    %v162 = vmul.f32 %v147, %v158
    %165 = vrot.lane.b32.xlu0 %v161, 32
    %v166 = vpop.permute.xlu0 %165
    %167 = vrot.lane.b32.xlu0 %v162, 32
    %v168 = vpop.permute.xlu0 %167
    %v171 = vadd.f32 %v151, %v166
    %v172 = vadd.f32 %v152, %v168
    %175 = vrot.lane.b32.xlu0 %v49, 32
    %v176 = vpop.permute.xlu0 %175
    %177 = vrot.lane.b32.xlu0 %v50, 32
    %v178 = vpop.permute.xlu0 %177
    %v181 = vmul.f32 %v143, %v176
    %v182 = vmul.f32 %v147, %v178
    %v183 = vmul.f32 %v145, %v52
    %v184 = vmul.f32 %v149, %v53
    %187 = vrot.lane.b32.xlu0 %v183, 32
    %v188 = vpop.permute.xlu0 %187
    %189 = vrot.lane.b32.xlu0 %v184, 32
    %v190 = vpop.permute.xlu0 %189
    %v193 = vadd.f32 %v181, %v188
    %v194 = vadd.f32 %v182, %v190
    %v195 = vld [vmem:[#allocation2] sm:$0xf]
    %v196 = vld [vmem:[#allocation2 + $0x4] sm:$0xf]
    %v197 = vld [vmem:[#allocation2 + $0x8] sm:$0xf]
    %v198 = vld [vmem:[#allocation2 + $0xc] sm:$0xf]
    %200 = vrot.lane.b32.xlu0 %v193, 96
    %v201 = vpop.permute.xlu0 %200
    %vm202 = vcmask 64512
    %v204 = vsel %vm202, %v171, 0
    %v206 = vsel %vm202, %v201, 0
    %208 = vmatprep.subr.mxu0 0.0
    %209 = vmatpush1.xpose.msra.mxu0 0.0
    %210 = vmatprep.subr.mxu0 0.0
    %211 = vmatpush1.xpose.msra.mxu0 0.0
    %212 = vmatprep.subr.mxu0 0.0
    %213 = vmatpush1.xpose.msra.mxu0 0.0
    %214 = vmatprep.subr.mxu0 0.0
    %215 = vmatpush1.xpose.msra.mxu0 0.0
    %216 = vmatprep.subr.mxu0 0.0
    %217 = vmatpush1.xpose.msra.mxu0 0.0
    %218 = vmatprep.subr.mxu0 0.0
    %219 = vmatpush1.xpose.msra.mxu0 0.0
    %220 = vmatprep.subr.mxu0 0.0
    %221 = vmatpush1.xpose.msra.mxu0 0.0
    %222 = vmatprep.subr.mxu0 0.0
    %223 = vmatpush1.xpose.msra.mxu0 0.0
    %224 = vmatprep.subr.mxu0 0.0
    %225 = vmatpush1.xpose.msra.mxu0 0.0
    %226 = vmatprep.subr.mxu0 0.0
    %227 = vmatpush1.xpose.msra.mxu0 0.0
    %228 = vmatprep.subr.mxu0 0.0
    %229 = vmatpush1.xpose.msra.mxu0 0.0
    %230 = vmatprep.subr.mxu0 0.0
    %231 = vmatpush1.xpose.msra.mxu0 0.0
    %232 = vmatprep.subr.mxu0 0.0
    %233 = vmatpush1.xpose.msra.mxu0 0.0
    %234 = vmatprep.subr.mxu0 0.0
    %235 = vmatpush1.xpose.msra.mxu0 0.0
    %236 = vmatprep.subr.mxu0 0.0
    %237 = vmatpush1.xpose.msra.mxu0 0.0
    %238 = vmatprep.subr.mxu0 0.0
    %239 = vmatpush1.xpose.msra.mxu0 %v206
    %240 = vmatprep.subr.mxu0 0.0
    %241 = vmatpush2.xpose.msra.mxu0 0.0
    %242 = vmatprep.subr.mxu0 0.0
    %243 = vmatpush2.xpose.msra.mxu0 0.0
    %244 = vmatprep.subr.mxu0 0.0
    %245 = vmatpush2.xpose.msra.mxu0 0.0
    %246 = vmatprep.subr.mxu0 0.0
    %247 = vmatpush2.xpose.msra.mxu0 0.0
    %248 = vmatprep.subr.mxu0 0.0
    %249 = vmatpush2.xpose.msra.mxu0 0.0
    %250 = vmatprep.subr.mxu0 0.0
    %251 = vmatpush2.xpose.msra.mxu0 0.0
    %252 = vmatprep.subr.mxu0 0.0
    %253 = vmatpush2.xpose.msra.mxu0 0.0
    %254 = vmatprep.subr.mxu0 0.0
    %255 = vmatpush2.xpose.msra.mxu0 0.0
    %256 = vmatprep.subr.mxu0 0.0
    %257 = vmatpush2.xpose.msra.mxu0 0.0
    %258 = vmatprep.subr.mxu0 0.0
    %259 = vmatpush2.xpose.msra.mxu0 0.0
    %260 = vmatprep.subr.mxu0 0.0
    %261 = vmatpush2.xpose.msra.mxu0 0.0
    %262 = vmatprep.subr.mxu0 0.0
    %263 = vmatpush2.xpose.msra.mxu0 0.0
    %264 = vmatprep.subr.mxu0 0.0
    %265 = vmatpush2.xpose.msra.mxu0 0.0
    %266 = vmatprep.subr.mxu0 0.0
    %267 = vmatpush2.xpose.msra.mxu0 0.0
    %268 = vmatprep.subr.mxu0 0.0
    %269 = vmatpush2.xpose.msra.mxu0 0.0
    %270 = vmatprep.subr.mxu0 0.0
    %271 = vmatpush2.xpose.msra.mxu0 0.0
    %272 = vmatprep.mubr.f32.mxu0 0.0
    %273 = vmatmul.mubr.f32.gmra.mxu0 %v204
    %v274 = vpop.f32.mrf.mxu0
    %v275 = vadd.f32 0.0, %v274
    %v276 = vpop.f32.mrf.mxu0
    %277 = vdwg.mxu0
    %279 = vrot.lane.b32.xlu0 %v194, 96
    %v280 = vpop.permute.xlu0 %279
    %v282 = vsel %vm202, %v172, 0
    %v284 = vsel %vm202, %v280, 0
    %286 = vmatprep.subr.mxu0 0.0
    %287 = vmatpush1.xpose.msra.mxu0 0.0
    %288 = vmatprep.subr.mxu0 0.0
    %289 = vmatpush1.xpose.msra.mxu0 0.0
    %290 = vmatprep.subr.mxu0 0.0
    %291 = vmatpush1.xpose.msra.mxu0 0.0
    %292 = vmatprep.subr.mxu0 0.0
    %293 = vmatpush1.xpose.msra.mxu0 0.0
    %294 = vmatprep.subr.mxu0 0.0
    %295 = vmatpush1.xpose.msra.mxu0 0.0
    %296 = vmatprep.subr.mxu0 0.0
    %297 = vmatpush1.xpose.msra.mxu0 0.0
    %298 = vmatprep.subr.mxu0 0.0
    %299 = vmatpush1.xpose.msra.mxu0 0.0
    %300 = vmatprep.subr.mxu0 0.0
    %301 = vmatpush1.xpose.msra.mxu0 0.0
    %302 = vmatprep.subr.mxu0 0.0
    %303 = vmatpush1.xpose.msra.mxu0 0.0
    %304 = vmatprep.subr.mxu0 0.0
    %305 = vmatpush1.xpose.msra.mxu0 0.0
    %306 = vmatprep.subr.mxu0 0.0
    %307 = vmatpush1.xpose.msra.mxu0 0.0
    %308 = vmatprep.subr.mxu0 0.0
    %309 = vmatpush1.xpose.msra.mxu0 0.0
    %310 = vmatprep.subr.mxu0 0.0
    %311 = vmatpush1.xpose.msra.mxu0 0.0
    %312 = vmatprep.subr.mxu0 0.0
    %313 = vmatpush1.xpose.msra.mxu0 0.0
    %314 = vmatprep.subr.mxu0 0.0
    %315 = vmatpush1.xpose.msra.mxu0 0.0
    %316 = vmatprep.subr.mxu0 0.0
    %317 = vmatpush1.xpose.msra.mxu0 %v284
    %318 = vmatprep.subr.mxu0 0.0
    %319 = vmatpush2.xpose.msra.mxu0 0.0
    %320 = vmatprep.subr.mxu0 0.0
    %321 = vmatpush2.xpose.msra.mxu0 0.0
    %322 = vmatprep.subr.mxu0 0.0
    %323 = vmatpush2.xpose.msra.mxu0 0.0
    %324 = vmatprep.subr.mxu0 0.0
    %325 = vmatpush2.xpose.msra.mxu0 0.0
    %326 = vmatprep.subr.mxu0 0.0
    %327 = vmatpush2.xpose.msra.mxu0 0.0
    %328 = vmatprep.subr.mxu0 0.0
    %329 = vmatpush2.xpose.msra.mxu0 0.0
    %330 = vmatprep.subr.mxu0 0.0
    %331 = vmatpush2.xpose.msra.mxu0 0.0
    %332 = vmatprep.subr.mxu0 0.0
    %333 = vmatpush2.xpose.msra.mxu0 0.0
    %334 = vmatprep.subr.mxu0 0.0
    %335 = vmatpush2.xpose.msra.mxu0 0.0
    %336 = vmatprep.subr.mxu0 0.0
    %337 = vmatpush2.xpose.msra.mxu0 0.0
    %338 = vmatprep.subr.mxu0 0.0
    %339 = vmatpush2.xpose.msra.mxu0 0.0
    %340 = vmatprep.subr.mxu0 0.0
    %341 = vmatpush2.xpose.msra.mxu0 0.0
    %342 = vmatprep.subr.mxu0 0.0
    %343 = vmatpush2.xpose.msra.mxu0 0.0
    %344 = vmatprep.subr.mxu0 0.0
    %345 = vmatpush2.xpose.msra.mxu0 0.0
    %346 = vmatprep.subr.mxu0 0.0
    %347 = vmatpush2.xpose.msra.mxu0 0.0
    %348 = vmatprep.subr.mxu0 0.0
    %349 = vmatpush2.xpose.msra.mxu0 0.0
    %350 = vmatprep.mubr.f32.mxu0 0.0
    %351 = vmatmul.mubr.f32.gmra.mxu0 %v282
    %v352 = vpop.f32.mrf.mxu0
    %v353 = vadd.f32 0.0, %v352
    %v354 = vpop.f32.mrf.mxu0
    %355 = vdwg.mxu0
    %v356 = vmul.f32 %v275, 0.35355338
    %v357 = vmul.f32 %v353, 0.35355338
    %v358 = vadd.f32 %v356, %v47
    %v359 = vadd.f32 %v357, %v48
    %v360 = vsel %vm202, %v358, -inf
    %361 = vmax.xlane.f32.xlu0 %v360
    %v362 = vpop.xlane.xlu0 %361
    %v363 = vsel %vm202, %v359, -inf
    %364 = vmax.xlane.f32.xlu0 %v363
    %v365 = vpop.xlane.xlu0 %364
    %v366 = vsub.f32 %v358, %v362
    %v367 = vsub.f32 %v359, %v365
    %v368 = vmul.f32 %v366, 1.442695
    %v369 = vpow.pop %v368
    %v370 = vmul.f32 %v367, 1.442695
    %v371 = vpow.pop %v370
    %v372 = vsel %vm202, %v369, 0.0
    %373 = vadd.xlane.f32.xlu0 %v372
    %v374 = vpop.xlane.xlu0 %373
    %v375 = vsel %vm202, %v371, 0.0
    %376 = vadd.xlane.f32.xlu0 %v375
    %v377 = vpop.xlane.xlu0 %376
    %v378 = vrcp.pop %v374
    %v379 = vrcp.pop %v377
    %v380 = vmul.f32 %v369, %v378
    %v381 = vmul.f32 %v371, %v379
    %383 = vrot.lane.b32.xlu0 %v143, 64
    %v384 = vpop.permute.xlu0 %383
    %v387 = vsel %vm202, %v380, 0
    %389 = vmatprep.subr.mxu0 0.0
    %390 = vmatpush1.msra.mxu0 0.0
    %391 = vmatprep.subr.mxu0 0.0
    %392 = vmatpush1.msra.mxu0 0.0
    %393 = vmatprep.subr.mxu0 0.0
    %394 = vmatpush1.msra.mxu0 0.0
    %395 = vmatprep.subr.mxu0 0.0
    %396 = vmatpush1.msra.mxu0 0.0
    %397 = vmatprep.subr.mxu0 0.0
    %398 = vmatpush1.msra.mxu0 0.0
    %399 = vmatprep.subr.mxu0 0.0
    %400 = vmatpush1.msra.mxu0 0.0
    %401 = vmatprep.subr.mxu0 0.0
    %402 = vmatpush1.msra.mxu0 0.0
    %403 = vmatprep.subr.mxu0 0.0
    %404 = vmatpush1.msra.mxu0 0.0
    %405 = vmatprep.subr.mxu0 0.0
    %406 = vmatpush1.msra.mxu0 0.0
    %407 = vmatprep.subr.mxu0 0.0
    %408 = vmatpush1.msra.mxu0 0.0
    %409 = vmatprep.subr.mxu0 0.0
    %410 = vmatpush1.msra.mxu0 0.0
    %411 = vmatprep.subr.mxu0 0.0
    %412 = vmatpush1.msra.mxu0 0.0
    %413 = vmatprep.subr.mxu0 0.0
    %414 = vmatpush1.msra.mxu0 0.0
    %415 = vmatprep.subr.mxu0 0.0
    %416 = vmatpush1.msra.mxu0 0.0
    %417 = vmatprep.subr.mxu0 0.0
    %418 = vmatpush1.msra.mxu0 0.0
    %419 = vmatprep.subr.mxu0 0.0
    %420 = vmatpush1.msra.mxu0 %v384
    %421 = vmatprep.subr.mxu0 0.0
    %422 = vmatpush2.msra.mxu0 0.0
    %423 = vmatprep.subr.mxu0 0.0
    %424 = vmatpush2.msra.mxu0 0.0
    %425 = vmatprep.subr.mxu0 0.0
    %426 = vmatpush2.msra.mxu0 0.0
    %427 = vmatprep.subr.mxu0 0.0
    %428 = vmatpush2.msra.mxu0 0.0
    %429 = vmatprep.subr.mxu0 0.0
    %430 = vmatpush2.msra.mxu0 0.0
    %431 = vmatprep.subr.mxu0 0.0
    %432 = vmatpush2.msra.mxu0 0.0
    %433 = vmatprep.subr.mxu0 0.0
    %434 = vmatpush2.msra.mxu0 0.0
    %435 = vmatprep.subr.mxu0 0.0
    %436 = vmatpush2.msra.mxu0 0.0
    %437 = vmatprep.subr.mxu0 0.0
    %438 = vmatpush2.msra.mxu0 0.0
    %439 = vmatprep.subr.mxu0 0.0
    %440 = vmatpush2.msra.mxu0 0.0
    %441 = vmatprep.subr.mxu0 0.0
    %442 = vmatpush2.msra.mxu0 0.0
    %443 = vmatprep.subr.mxu0 0.0
    %444 = vmatpush2.msra.mxu0 0.0
    %445 = vmatprep.subr.mxu0 0.0
    %446 = vmatpush2.msra.mxu0 0.0
    %447 = vmatprep.subr.mxu0 0.0
    %448 = vmatpush2.msra.mxu0 0.0
    %449 = vmatprep.subr.mxu0 0.0
    %450 = vmatpush2.msra.mxu0 0.0
    %451 = vmatprep.subr.mxu0 0.0
    %452 = vmatpush2.msra.mxu0 0.0
    %453 = vmatprep.mubr.f32.mxu0 0.0
    %454 = vmatmul.mubr.f32.gmra.mxu0 %v387
    %v455 = vpop.f32.mrf.mxu0
    %v456 = vadd.f32 0.0, %v455
    %v457 = vpop.f32.mrf.mxu0
    %458 = vdwg.mxu0
    %460 = vrot.lane.b32.xlu0 %v147, 64
    %v461 = vpop.permute.xlu0 %460
    %v464 = vsel %vm202, %v381, 0
    %466 = vmatprep.subr.mxu0 0.0
    %467 = vmatpush1.msra.mxu0 0.0
    %468 = vmatprep.subr.mxu0 0.0
    %469 = vmatpush1.msra.mxu0 0.0
    %470 = vmatprep.subr.mxu0 0.0
    %471 = vmatpush1.msra.mxu0 0.0
    %472 = vmatprep.subr.mxu0 0.0
    %473 = vmatpush1.msra.mxu0 0.0
    %474 = vmatprep.subr.mxu0 0.0
    %475 = vmatpush1.msra.mxu0 0.0
    %476 = vmatprep.subr.mxu0 0.0
    %477 = vmatpush1.msra.mxu0 0.0
    %478 = vmatprep.subr.mxu0 0.0
    %479 = vmatpush1.msra.mxu0 0.0
    %480 = vmatprep.subr.mxu0 0.0
    %481 = vmatpush1.msra.mxu0 0.0
    %482 = vmatprep.subr.mxu0 0.0
    %483 = vmatpush1.msra.mxu0 0.0
    %484 = vmatprep.subr.mxu0 0.0
    %485 = vmatpush1.msra.mxu0 0.0
    %486 = vmatprep.subr.mxu0 0.0
    %487 = vmatpush1.msra.mxu0 0.0
    %488 = vmatprep.subr.mxu0 0.0
    %489 = vmatpush1.msra.mxu0 0.0
    %490 = vmatprep.subr.mxu0 0.0
    %491 = vmatpush1.msra.mxu0 0.0
    %492 = vmatprep.subr.mxu0 0.0
    %493 = vmatpush1.msra.mxu0 0.0
    %494 = vmatprep.subr.mxu0 0.0
    %495 = vmatpush1.msra.mxu0 0.0
    %496 = vmatprep.subr.mxu0 0.0
    %497 = vmatpush1.msra.mxu0 %v461
    %498 = vmatprep.subr.mxu0 0.0
    %499 = vmatpush2.msra.mxu0 0.0
    %500 = vmatprep.subr.mxu0 0.0
    %501 = vmatpush2.msra.mxu0 0.0
    %502 = vmatprep.subr.mxu0 0.0
    %503 = vmatpush2.msra.mxu0 0.0
    %504 = vmatprep.subr.mxu0 0.0
    %505 = vmatpush2.msra.mxu0 0.0
    %506 = vmatprep.subr.mxu0 0.0
    %507 = vmatpush2.msra.mxu0 0.0
    %508 = vmatprep.subr.mxu0 0.0
    %509 = vmatpush2.msra.mxu0 0.0
    %510 = vmatprep.subr.mxu0 0.0
    %511 = vmatpush2.msra.mxu0 0.0
    %512 = vmatprep.subr.mxu0 0.0
    %513 = vmatpush2.msra.mxu0 0.0
    %514 = vmatprep.subr.mxu0 0.0
    %515 = vmatpush2.msra.mxu0 0.0
    %516 = vmatprep.subr.mxu0 0.0
    %517 = vmatpush2.msra.mxu0 0.0
    %518 = vmatprep.subr.mxu0 0.0
    %519 = vmatpush2.msra.mxu0 0.0
    %520 = vmatprep.subr.mxu0 0.0
    %521 = vmatpush2.msra.mxu0 0.0
    %522 = vmatprep.subr.mxu0 0.0
    %523 = vmatpush2.msra.mxu0 0.0
    %524 = vmatprep.subr.mxu0 0.0
    %525 = vmatpush2.msra.mxu0 0.0
    %526 = vmatprep.subr.mxu0 0.0
    %527 = vmatpush2.msra.mxu0 0.0
    %528 = vmatprep.subr.mxu0 0.0
    %529 = vmatpush2.msra.mxu0 0.0
    %530 = vmatprep.mubr.f32.mxu0 0.0
    %531 = vmatmul.mubr.f32.gmra.mxu0 %v464
    %v532 = vpop.f32.mrf.mxu0
    %v533 = vadd.f32 0.0, %v532
    %v534 = vpop.f32.mrf.mxu0
    %535 = vdwg.mxu0
    %v536 = vpack.c.bf16 %v533, %v456
    %537 = vrot.lane.b32.xlu0 %v171, 120
    %v538 = vpop.permute.xlu0 %537
    %539 = vrot.lane.b32.xlu0 %v193, 88
    %v540 = vpop.permute.xlu0 %539
    %v541 = vsel %vm202, %v538, 0
    %v543 = vsel %vm202, %v540, 0
    %545 = vmatprep.subr.mxu0 0.0
    %546 = vmatpush1.xpose.msra.mxu0 0.0
    %547 = vmatprep.subr.mxu0 0.0
    %548 = vmatpush1.xpose.msra.mxu0 0.0
    %549 = vmatprep.subr.mxu0 0.0
    %550 = vmatpush1.xpose.msra.mxu0 0.0
    %551 = vmatprep.subr.mxu0 0.0
    %552 = vmatpush1.xpose.msra.mxu0 0.0
    %553 = vmatprep.subr.mxu0 0.0
    %554 = vmatpush1.xpose.msra.mxu0 0.0
    %555 = vmatprep.subr.mxu0 0.0
    %556 = vmatpush1.xpose.msra.mxu0 0.0
    %557 = vmatprep.subr.mxu0 0.0
    %558 = vmatpush1.xpose.msra.mxu0 0.0
    %559 = vmatprep.subr.mxu0 0.0
    %560 = vmatpush1.xpose.msra.mxu0 0.0
    %561 = vmatprep.subr.mxu0 0.0
    %562 = vmatpush1.xpose.msra.mxu0 0.0
    %563 = vmatprep.subr.mxu0 0.0
    %564 = vmatpush1.xpose.msra.mxu0 0.0
    %565 = vmatprep.subr.mxu0 0.0
    %566 = vmatpush1.xpose.msra.mxu0 0.0
    %567 = vmatprep.subr.mxu0 0.0
    %568 = vmatpush1.xpose.msra.mxu0 0.0
    %569 = vmatprep.subr.mxu0 0.0
    %570 = vmatpush1.xpose.msra.mxu0 0.0
    %571 = vmatprep.subr.mxu0 0.0
    %572 = vmatpush1.xpose.msra.mxu0 0.0
    %573 = vmatprep.subr.mxu0 0.0
    %574 = vmatpush1.xpose.msra.mxu0 0.0
    %575 = vmatprep.subr.mxu0 0.0
    %576 = vmatpush1.xpose.msra.mxu0 %v543
    %577 = vmatprep.subr.mxu0 0.0
    %578 = vmatpush2.xpose.msra.mxu0 0.0
    %579 = vmatprep.subr.mxu0 0.0
    %580 = vmatpush2.xpose.msra.mxu0 0.0
    %581 = vmatprep.subr.mxu0 0.0
    %582 = vmatpush2.xpose.msra.mxu0 0.0
    %583 = vmatprep.subr.mxu0 0.0
    %584 = vmatpush2.xpose.msra.mxu0 0.0
    %585 = vmatprep.subr.mxu0 0.0
    %586 = vmatpush2.xpose.msra.mxu0 0.0
    %587 = vmatprep.subr.mxu0 0.0
    %588 = vmatpush2.xpose.msra.mxu0 0.0
    %589 = vmatprep.subr.mxu0 0.0
    %590 = vmatpush2.xpose.msra.mxu0 0.0
    %591 = vmatprep.subr.mxu0 0.0
    %592 = vmatpush2.xpose.msra.mxu0 0.0
    %593 = vmatprep.subr.mxu0 0.0
    %594 = vmatpush2.xpose.msra.mxu0 0.0
    %595 = vmatprep.subr.mxu0 0.0
    %596 = vmatpush2.xpose.msra.mxu0 0.0
    %597 = vmatprep.subr.mxu0 0.0
    %598 = vmatpush2.xpose.msra.mxu0 0.0
    %599 = vmatprep.subr.mxu0 0.0
    %600 = vmatpush2.xpose.msra.mxu0 0.0
    %601 = vmatprep.subr.mxu0 0.0
    %602 = vmatpush2.xpose.msra.mxu0 0.0
    %603 = vmatprep.subr.mxu0 0.0
    %604 = vmatpush2.xpose.msra.mxu0 0.0
    %605 = vmatprep.subr.mxu0 0.0
    %606 = vmatpush2.xpose.msra.mxu0 0.0
    %607 = vmatprep.subr.mxu0 0.0
    %608 = vmatpush2.xpose.msra.mxu0 0.0
    %609 = vmatprep.mubr.f32.mxu0 0.0
    %610 = vmatmul.mubr.f32.gmra.mxu0 %v541
    %v611 = vpop.f32.mrf.mxu0
    %v612 = vadd.f32 0.0, %v611
    %v613 = vpop.f32.mrf.mxu0
    %614 = vdwg.mxu0
    %615 = vrot.lane.b32.xlu0 %v172, 120
    %v616 = vpop.permute.xlu0 %615
    %617 = vrot.lane.b32.xlu0 %v194, 88
    %v618 = vpop.permute.xlu0 %617
    %v619 = vsel %vm202, %v616, 0
    %v621 = vsel %vm202, %v618, 0
    %623 = vmatprep.subr.mxu0 0.0
    %624 = vmatpush1.xpose.msra.mxu0 0.0
    %625 = vmatprep.subr.mxu0 0.0
    %626 = vmatpush1.xpose.msra.mxu0 0.0
    %627 = vmatprep.subr.mxu0 0.0
    %628 = vmatpush1.xpose.msra.mxu0 0.0
    %629 = vmatprep.subr.mxu0 0.0
    %630 = vmatpush1.xpose.msra.mxu0 0.0
    %631 = vmatprep.subr.mxu0 0.0
    %632 = vmatpush1.xpose.msra.mxu0 0.0
    %633 = vmatprep.subr.mxu0 0.0
    %634 = vmatpush1.xpose.msra.mxu0 0.0
    %635 = vmatprep.subr.mxu0 0.0
    %636 = vmatpush1.xpose.msra.mxu0 0.0
    %637 = vmatprep.subr.mxu0 0.0
    %638 = vmatpush1.xpose.msra.mxu0 0.0
    %639 = vmatprep.subr.mxu0 0.0
    %640 = vmatpush1.xpose.msra.mxu0 0.0
    %641 = vmatprep.subr.mxu0 0.0
    %642 = vmatpush1.xpose.msra.mxu0 0.0
    %643 = vmatprep.subr.mxu0 0.0
    %644 = vmatpush1.xpose.msra.mxu0 0.0
    %645 = vmatprep.subr.mxu0 0.0
    %646 = vmatpush1.xpose.msra.mxu0 0.0
    %647 = vmatprep.subr.mxu0 0.0
    %648 = vmatpush1.xpose.msra.mxu0 0.0
    %649 = vmatprep.subr.mxu0 0.0
    %650 = vmatpush1.xpose.msra.mxu0 0.0
    %651 = vmatprep.subr.mxu0 0.0
    %652 = vmatpush1.xpose.msra.mxu0 0.0
    %653 = vmatprep.subr.mxu0 0.0
    %654 = vmatpush1.xpose.msra.mxu0 %v621
    %655 = vmatprep.subr.mxu0 0.0
    %656 = vmatpush2.xpose.msra.mxu0 0.0
    %657 = vmatprep.subr.mxu0 0.0
    %658 = vmatpush2.xpose.msra.mxu0 0.0
    %659 = vmatprep.subr.mxu0 0.0
    %660 = vmatpush2.xpose.msra.mxu0 0.0
    %661 = vmatprep.subr.mxu0 0.0
    %662 = vmatpush2.xpose.msra.mxu0 0.0
    %663 = vmatprep.subr.mxu0 0.0
    %664 = vmatpush2.xpose.msra.mxu0 0.0
    %665 = vmatprep.subr.mxu0 0.0
    %666 = vmatpush2.xpose.msra.mxu0 0.0
    %667 = vmatprep.subr.mxu0 0.0
    %668 = vmatpush2.xpose.msra.mxu0 0.0
    %669 = vmatprep.subr.mxu0 0.0
    %670 = vmatpush2.xpose.msra.mxu0 0.0
    %671 = vmatprep.subr.mxu0 0.0
    %672 = vmatpush2.xpose.msra.mxu0 0.0
    %673 = vmatprep.subr.mxu0 0.0
    %674 = vmatpush2.xpose.msra.mxu0 0.0
    %675 = vmatprep.subr.mxu0 0.0
    %676 = vmatpush2.xpose.msra.mxu0 0.0
    %677 = vmatprep.subr.mxu0 0.0
    %678 = vmatpush2.xpose.msra.mxu0 0.0
    %679 = vmatprep.subr.mxu0 0.0
    %680 = vmatpush2.xpose.msra.mxu0 0.0
    %681 = vmatprep.subr.mxu0 0.0
    %682 = vmatpush2.xpose.msra.mxu0 0.0
    %683 = vmatprep.subr.mxu0 0.0
    %684 = vmatpush2.xpose.msra.mxu0 0.0
    %685 = vmatprep.subr.mxu0 0.0
    %686 = vmatpush2.xpose.msra.mxu0 0.0
    %687 = vmatprep.mubr.f32.mxu0 0.0
    %688 = vmatmul.mubr.f32.gmra.mxu0 %v619
    %v689 = vpop.f32.mrf.mxu0
    %v690 = vadd.f32 0.0, %v689
    %v691 = vpop.f32.mrf.mxu0
    %692 = vdwg.mxu0
    %v693 = vmul.f32 %v612, 0.35355338
    %v694 = vmul.f32 %v690, 0.35355338
    %v695 = vadd.f32 %v693, %v47
    %v696 = vadd.f32 %v694, %v48
    %v697 = vsel %vm202, %v695, -inf
    %698 = vmax.xlane.f32.xlu0 %v697
    %v699 = vpop.xlane.xlu0 %698
    %v700 = vsel %vm202, %v696, -inf
    %701 = vmax.xlane.f32.xlu0 %v700
    %v702 = vpop.xlane.xlu0 %701
    %v703 = vsub.f32 %v695, %v699
    %v704 = vsub.f32 %v696, %v702
    %v705 = vmul.f32 %v703, 1.442695
    %v706 = vpow.pop %v705
    %v707 = vmul.f32 %v704, 1.442695
    %v708 = vpow.pop %v707
    %v709 = vsel %vm202, %v706, 0.0
    %710 = vadd.xlane.f32.xlu0 %v709
    %v711 = vpop.xlane.xlu0 %710
    %v712 = vsel %vm202, %v708, 0.0
    %713 = vadd.xlane.f32.xlu0 %v712
    %v714 = vpop.xlane.xlu0 %713
    %v715 = vrcp.pop %v711
    %v716 = vrcp.pop %v714
    %v717 = vmul.f32 %v706, %v715
    %v718 = vmul.f32 %v708, %v716
    %719 = vrot.lane.b32.xlu0 %v143, 56
    %v720 = vpop.permute.xlu0 %719
    %v723 = vsel %vm202, %v717, 0
    %725 = vmatprep.subr.mxu0 0.0
    %726 = vmatpush1.msra.mxu0 0.0
    %727 = vmatprep.subr.mxu0 0.0
    %728 = vmatpush1.msra.mxu0 0.0
    %729 = vmatprep.subr.mxu0 0.0
    %730 = vmatpush1.msra.mxu0 0.0
    %731 = vmatprep.subr.mxu0 0.0
    %732 = vmatpush1.msra.mxu0 0.0
    %733 = vmatprep.subr.mxu0 0.0
    %734 = vmatpush1.msra.mxu0 0.0
    %735 = vmatprep.subr.mxu0 0.0
    %736 = vmatpush1.msra.mxu0 0.0
    %737 = vmatprep.subr.mxu0 0.0
    %738 = vmatpush1.msra.mxu0 0.0
    %739 = vmatprep.subr.mxu0 0.0
    %740 = vmatpush1.msra.mxu0 0.0
    %741 = vmatprep.subr.mxu0 0.0
    %742 = vmatpush1.msra.mxu0 0.0
    %743 = vmatprep.subr.mxu0 0.0
    %744 = vmatpush1.msra.mxu0 0.0
    %745 = vmatprep.subr.mxu0 0.0
    %746 = vmatpush1.msra.mxu0 0.0
    %747 = vmatprep.subr.mxu0 0.0
    %748 = vmatpush1.msra.mxu0 0.0
    %749 = vmatprep.subr.mxu0 0.0
    %750 = vmatpush1.msra.mxu0 0.0
    %751 = vmatprep.subr.mxu0 0.0
    %752 = vmatpush1.msra.mxu0 0.0
    %753 = vmatprep.subr.mxu0 0.0
    %754 = vmatpush1.msra.mxu0 0.0
    %755 = vmatprep.subr.mxu0 0.0
    %756 = vmatpush1.msra.mxu0 %v720
    %757 = vmatprep.subr.mxu0 0.0
    %758 = vmatpush2.msra.mxu0 0.0
    %759 = vmatprep.subr.mxu0 0.0
    %760 = vmatpush2.msra.mxu0 0.0
    %761 = vmatprep.subr.mxu0 0.0
    %762 = vmatpush2.msra.mxu0 0.0
    %763 = vmatprep.subr.mxu0 0.0
    %764 = vmatpush2.msra.mxu0 0.0
    %765 = vmatprep.subr.mxu0 0.0
    %766 = vmatpush2.msra.mxu0 0.0
    %767 = vmatprep.subr.mxu0 0.0
    %768 = vmatpush2.msra.mxu0 0.0
    %769 = vmatprep.subr.mxu0 0.0
    %770 = vmatpush2.msra.mxu0 0.0
    %771 = vmatprep.subr.mxu0 0.0
    %772 = vmatpush2.msra.mxu0 0.0
    %773 = vmatprep.subr.mxu0 0.0
    %774 = vmatpush2.msra.mxu0 0.0
    %775 = vmatprep.subr.mxu0 0.0
    %776 = vmatpush2.msra.mxu0 0.0
    %777 = vmatprep.subr.mxu0 0.0
    %778 = vmatpush2.msra.mxu0 0.0
    %779 = vmatprep.subr.mxu0 0.0
    %780 = vmatpush2.msra.mxu0 0.0
    %781 = vmatprep.subr.mxu0 0.0
    %782 = vmatpush2.msra.mxu0 0.0
    %783 = vmatprep.subr.mxu0 0.0
    %784 = vmatpush2.msra.mxu0 0.0
    %785 = vmatprep.subr.mxu0 0.0
    %786 = vmatpush2.msra.mxu0 0.0
    %787 = vmatprep.subr.mxu0 0.0
    %788 = vmatpush2.msra.mxu0 0.0
    %789 = vmatprep.mubr.f32.mxu0 0.0
    %790 = vmatmul.mubr.f32.gmra.mxu0 %v723
    %v791 = vpop.f32.mrf.mxu0
    %v792 = vadd.f32 0.0, %v791
    %v793 = vpop.f32.mrf.mxu0
    %794 = vdwg.mxu0
    %795 = vrot.lane.b32.xlu0 %v147, 56
    %v796 = vpop.permute.xlu0 %795
    %v799 = vsel %vm202, %v718, 0
    %801 = vmatprep.subr.mxu0 0.0
    %802 = vmatpush1.msra.mxu0 0.0
    %803 = vmatprep.subr.mxu0 0.0
    %804 = vmatpush1.msra.mxu0 0.0
    %805 = vmatprep.subr.mxu0 0.0
    %806 = vmatpush1.msra.mxu0 0.0
    %807 = vmatprep.subr.mxu0 0.0
    %808 = vmatpush1.msra.mxu0 0.0
    %809 = vmatprep.subr.mxu0 0.0
    %810 = vmatpush1.msra.mxu0 0.0
    %811 = vmatprep.subr.mxu0 0.0
    %812 = vmatpush1.msra.mxu0 0.0
    %813 = vmatprep.subr.mxu0 0.0
    %814 = vmatpush1.msra.mxu0 0.0
    %815 = vmatprep.subr.mxu0 0.0
    %816 = vmatpush1.msra.mxu0 0.0
    %817 = vmatprep.subr.mxu0 0.0
    %818 = vmatpush1.msra.mxu0 0.0
    %819 = vmatprep.subr.mxu0 0.0
    %820 = vmatpush1.msra.mxu0 0.0
    %821 = vmatprep.subr.mxu0 0.0
    %822 = vmatpush1.msra.mxu0 0.0
    %823 = vmatprep.subr.mxu0 0.0
    %824 = vmatpush1.msra.mxu0 0.0
    %825 = vmatprep.subr.mxu0 0.0
    %826 = vmatpush1.msra.mxu0 0.0
    %827 = vmatprep.subr.mxu0 0.0
    %828 = vmatpush1.msra.mxu0 0.0
    %829 = vmatprep.subr.mxu0 0.0
    %830 = vmatpush1.msra.mxu0 0.0
    %831 = vmatprep.subr.mxu0 0.0
    %832 = vmatpush1.msra.mxu0 %v796
    %833 = vmatprep.subr.mxu0 0.0
    %834 = vmatpush2.msra.mxu0 0.0
    %835 = vmatprep.subr.mxu0 0.0
    %836 = vmatpush2.msra.mxu0 0.0
    %837 = vmatprep.subr.mxu0 0.0
    %838 = vmatpush2.msra.mxu0 0.0
    %839 = vmatprep.subr.mxu0 0.0
    %840 = vmatpush2.msra.mxu0 0.0
    %841 = vmatprep.subr.mxu0 0.0
    %842 = vmatpush2.msra.mxu0 0.0
    %843 = vmatprep.subr.mxu0 0.0
    %844 = vmatpush2.msra.mxu0 0.0
    %845 = vmatprep.subr.mxu0 0.0
    %846 = vmatpush2.msra.mxu0 0.0
    %847 = vmatprep.subr.mxu0 0.0
    %848 = vmatpush2.msra.mxu0 0.0
    %849 = vmatprep.subr.mxu0 0.0
    %850 = vmatpush2.msra.mxu0 0.0
    %851 = vmatprep.subr.mxu0 0.0
    %852 = vmatpush2.msra.mxu0 0.0
    %853 = vmatprep.subr.mxu0 0.0
    %854 = vmatpush2.msra.mxu0 0.0
    %855 = vmatprep.subr.mxu0 0.0
    %856 = vmatpush2.msra.mxu0 0.0
    %857 = vmatprep.subr.mxu0 0.0
    %858 = vmatpush2.msra.mxu0 0.0
    %859 = vmatprep.subr.mxu0 0.0
    %860 = vmatpush2.msra.mxu0 0.0
    %861 = vmatprep.subr.mxu0 0.0
    %862 = vmatpush2.msra.mxu0 0.0
    %863 = vmatprep.subr.mxu0 0.0
    %864 = vmatpush2.msra.mxu0 0.0
    %865 = vmatprep.mubr.f32.mxu0 0.0
    %866 = vmatmul.mubr.f32.gmra.mxu0 %v799
    %v867 = vpop.f32.mrf.mxu0
    %v868 = vadd.f32 0.0, %v867
    %v869 = vpop.f32.mrf.mxu0
    %870 = vdwg.mxu0
    %v871 = vpack.c.bf16 %v868, %v792
    %v873 = vsel %vm202, %v871, 0
    %vm875 = vcmask 1043456
    %v877 = vsel %vm875, %v196, 0
    %879 = vmatprep.subr.bf16.mxu0 0
    %880 = vmatpush1.bf16.msra.mxu0 0
    %881 = vmatprep.subr.bf16.mxu0 0
    %882 = vmatpush1.bf16.msra.mxu0 0
    %883 = vmatprep.subr.bf16.mxu0 0
    %884 = vmatpush1.bf16.msra.mxu0 0
    %885 = vmatprep.subr.bf16.mxu0 0
    %886 = vmatpush1.bf16.msra.mxu0 0
    %887 = vmatprep.subr.bf16.mxu0 0
    %888 = vmatpush1.bf16.msra.mxu0 0
    %889 = vmatprep.subr.bf16.mxu0 0
    %890 = vmatpush1.bf16.msra.mxu0 0
    %891 = vmatprep.subr.bf16.mxu0 0
    %892 = vmatpush1.bf16.msra.mxu0 0
    %893 = vmatprep.subr.bf16.mxu0 0
    %894 = vmatpush1.bf16.msra.mxu0 %v877
    %895 = vmatprep.subr.bf16.mxu0 0
    %896 = vmatpush2.bf16.msra.mxu0 0
    %897 = vmatprep.subr.bf16.mxu0 0
    %898 = vmatpush2.bf16.msra.mxu0 0
    %899 = vmatprep.subr.bf16.mxu0 0
    %900 = vmatpush2.bf16.msra.mxu0 0
    %901 = vmatprep.subr.bf16.mxu0 0
    %902 = vmatpush2.bf16.msra.mxu0 0
    %903 = vmatprep.subr.bf16.mxu0 0
    %904 = vmatpush2.bf16.msra.mxu0 0
    %905 = vmatprep.subr.bf16.mxu0 0
    %906 = vmatpush2.bf16.msra.mxu0 0
    %907 = vmatprep.subr.bf16.mxu0 0
    %908 = vmatpush2.bf16.msra.mxu0 0
    %909 = vmatprep.subr.bf16.mxu0 0
    %910 = vmatpush2.bf16.msra.mxu0 0
    %911 = vmatprep.mubr.bf16.mxu0 0
    %912 = vmatmul.mubr.bf16.gmra.mxu0 %v873
    %v913 = vpop.f32.mrf.mxu0
    %v914 = vadd.f32 0.0, %v913
    %v915 = vpop.f32.mrf.mxu0
    %v916 = vpop.f32.mrf.mxu0
    %v917 = vadd.f32 0.0, %v916
    %v918 = vpop.f32.mrf.mxu0
    %919 = vdwg.mxu0
    %v921 = vsel %vm202, %v536, 0
    %v924 = vsel %vm875, %v195, 0
    %926 = vmatprep.subr.bf16.mxu0 0
    %927 = vmatpush1.bf16.msra.mxu0 0
    %928 = vmatprep.subr.bf16.mxu0 0
    %929 = vmatpush1.bf16.msra.mxu0 0
    %930 = vmatprep.subr.bf16.mxu0 0
    %931 = vmatpush1.bf16.msra.mxu0 0
    %932 = vmatprep.subr.bf16.mxu0 0
    %933 = vmatpush1.bf16.msra.mxu0 0
    %934 = vmatprep.subr.bf16.mxu0 0
    %935 = vmatpush1.bf16.msra.mxu0 0
    %936 = vmatprep.subr.bf16.mxu0 0
    %937 = vmatpush1.bf16.msra.mxu0 0
    %938 = vmatprep.subr.bf16.mxu0 0
    %939 = vmatpush1.bf16.msra.mxu0 0
    %940 = vmatprep.subr.bf16.mxu0 0
    %941 = vmatpush1.bf16.msra.mxu0 %v924
    %942 = vmatprep.subr.bf16.mxu0 0
    %943 = vmatpush2.bf16.msra.mxu0 0
    %944 = vmatprep.subr.bf16.mxu0 0
    %945 = vmatpush2.bf16.msra.mxu0 0
    %946 = vmatprep.subr.bf16.mxu0 0
    %947 = vmatpush2.bf16.msra.mxu0 0
    %948 = vmatprep.subr.bf16.mxu0 0
    %949 = vmatpush2.bf16.msra.mxu0 0
    %950 = vmatprep.subr.bf16.mxu0 0
    %951 = vmatpush2.bf16.msra.mxu0 0
    %952 = vmatprep.subr.bf16.mxu0 0
    %953 = vmatpush2.bf16.msra.mxu0 0
    %954 = vmatprep.subr.bf16.mxu0 0
    %955 = vmatpush2.bf16.msra.mxu0 0
    %956 = vmatprep.subr.bf16.mxu0 0
    %957 = vmatpush2.bf16.msra.mxu0 0
    %958 = vmatprep.mubr.bf16.mxu0 0
    %959 = vmatmul.mubr.bf16.gmra.mxu0 %v921
    %v960 = vpop.f32.mrf.mxu0
    %v961 = vadd.f32 %v914, %v960
    %v962 = vpop.f32.mrf.mxu0
    %v963 = vpop.f32.mrf.mxu0
    %v964 = vadd.f32 %v917, %v963
    %v965 = vpop.f32.mrf.mxu0
    %966 = vdwg.mxu0
    %967 = vrot.lane.b32.xlu0 %v171, 112
    %v968 = vpop.permute.xlu0 %967
    %969 = vrot.lane.b32.xlu0 %v193, 80
    %v970 = vpop.permute.xlu0 %969
    %v971 = vsel %vm202, %v968, 0
    %v973 = vsel %vm202, %v970, 0
    %975 = vmatprep.subr.mxu0 0.0
    %976 = vmatpush1.xpose.msra.mxu0 0.0
    %977 = vmatprep.subr.mxu0 0.0
    %978 = vmatpush1.xpose.msra.mxu0 0.0
    %979 = vmatprep.subr.mxu0 0.0
    %980 = vmatpush1.xpose.msra.mxu0 0.0
    %981 = vmatprep.subr.mxu0 0.0
    %982 = vmatpush1.xpose.msra.mxu0 0.0
    %983 = vmatprep.subr.mxu0 0.0
    %984 = vmatpush1.xpose.msra.mxu0 0.0
    %985 = vmatprep.subr.mxu0 0.0
    %986 = vmatpush1.xpose.msra.mxu0 0.0
    %987 = vmatprep.subr.mxu0 0.0
    %988 = vmatpush1.xpose.msra.mxu0 0.0
    %989 = vmatprep.subr.mxu0 0.0
    %990 = vmatpush1.xpose.msra.mxu0 0.0
    %991 = vmatprep.subr.mxu0 0.0
    %992 = vmatpush1.xpose.msra.mxu0 0.0
    %993 = vmatprep.subr.mxu0 0.0
    %994 = vmatpush1.xpose.msra.mxu0 0.0
    %995 = vmatprep.subr.mxu0 0.0
    %996 = vmatpush1.xpose.msra.mxu0 0.0
    %997 = vmatprep.subr.mxu0 0.0
    %998 = vmatpush1.xpose.msra.mxu0 0.0
    %999 = vmatprep.subr.mxu0 0.0
    %1000 = vmatpush1.xpose.msra.mxu0 0.0
    %1001 = vmatprep.subr.mxu0 0.0
    %1002 = vmatpush1.xpose.msra.mxu0 0.0
    %1003 = vmatprep.subr.mxu0 0.0
    %1004 = vmatpush1.xpose.msra.mxu0 0.0
    %1005 = vmatprep.subr.mxu0 0.0
    %1006 = vmatpush1.xpose.msra.mxu0 %v973
    %1007 = vmatprep.subr.mxu0 0.0
    %1008 = vmatpush2.xpose.msra.mxu0 0.0
    %1009 = vmatprep.subr.mxu0 0.0
    %1010 = vmatpush2.xpose.msra.mxu0 0.0
    %1011 = vmatprep.subr.mxu0 0.0
    %1012 = vmatpush2.xpose.msra.mxu0 0.0
    %1013 = vmatprep.subr.mxu0 0.0
    %1014 = vmatpush2.xpose.msra.mxu0 0.0
    %1015 = vmatprep.subr.mxu0 0.0
    %1016 = vmatpush2.xpose.msra.mxu0 0.0
    %1017 = vmatprep.subr.mxu0 0.0
    %1018 = vmatpush2.xpose.msra.mxu0 0.0
    %1019 = vmatprep.subr.mxu0 0.0
    %1020 = vmatpush2.xpose.msra.mxu0 0.0
    %1021 = vmatprep.subr.mxu0 0.0
    %1022 = vmatpush2.xpose.msra.mxu0 0.0
    %1023 = vmatprep.subr.mxu0 0.0
    %1024 = vmatpush2.xpose.msra.mxu0 0.0
    %1025 = vmatprep.subr.mxu0 0.0
    %1026 = vmatpush2.xpose.msra.mxu0 0.0
    %1027 = vmatprep.subr.mxu0 0.0
    %1028 = vmatpush2.xpose.msra.mxu0 0.0
    %1029 = vmatprep.subr.mxu0 0.0
    %1030 = vmatpush2.xpose.msra.mxu0 0.0
    %1031 = vmatprep.subr.mxu0 0.0
    %1032 = vmatpush2.xpose.msra.mxu0 0.0
    %1033 = vmatprep.subr.mxu0 0.0
    %1034 = vmatpush2.xpose.msra.mxu0 0.0
    %1035 = vmatprep.subr.mxu0 0.0
    %1036 = vmatpush2.xpose.msra.mxu0 0.0
    %1037 = vmatprep.subr.mxu0 0.0
    %1038 = vmatpush2.xpose.msra.mxu0 0.0
    %1039 = vmatprep.mubr.f32.mxu0 0.0
    %1040 = vmatmul.mubr.f32.gmra.mxu0 %v971
    %v1041 = vpop.f32.mrf.mxu0
    %v1042 = vadd.f32 0.0, %v1041
    %v1043 = vpop.f32.mrf.mxu0
    %1044 = vdwg.mxu0
    %1045 = vrot.lane.b32.xlu0 %v172, 112
    %v1046 = vpop.permute.xlu0 %1045
    %1047 = vrot.lane.b32.xlu0 %v194, 80
    %v1048 = vpop.permute.xlu0 %1047
    %v1049 = vsel %vm202, %v1046, 0
    %v1051 = vsel %vm202, %v1048, 0
    %1053 = vmatprep.subr.mxu0 0.0
    %1054 = vmatpush1.xpose.msra.mxu0 0.0
    %1055 = vmatprep.subr.mxu0 0.0
    %1056 = vmatpush1.xpose.msra.mxu0 0.0
    %1057 = vmatprep.subr.mxu0 0.0
    %1058 = vmatpush1.xpose.msra.mxu0 0.0
    %1059 = vmatprep.subr.mxu0 0.0
    %1060 = vmatpush1.xpose.msra.mxu0 0.0
    %1061 = vmatprep.subr.mxu0 0.0
    %1062 = vmatpush1.xpose.msra.mxu0 0.0
    %1063 = vmatprep.subr.mxu0 0.0
    %1064 = vmatpush1.xpose.msra.mxu0 0.0
    %1065 = vmatprep.subr.mxu0 0.0
    %1066 = vmatpush1.xpose.msra.mxu0 0.0
    %1067 = vmatprep.subr.mxu0 0.0
    %1068 = vmatpush1.xpose.msra.mxu0 0.0
    %1069 = vmatprep.subr.mxu0 0.0
    %1070 = vmatpush1.xpose.msra.mxu0 0.0
    %1071 = vmatprep.subr.mxu0 0.0
    %1072 = vmatpush1.xpose.msra.mxu0 0.0
    %1073 = vmatprep.subr.mxu0 0.0
    %1074 = vmatpush1.xpose.msra.mxu0 0.0
    %1075 = vmatprep.subr.mxu0 0.0
    %1076 = vmatpush1.xpose.msra.mxu0 0.0
    %1077 = vmatprep.subr.mxu0 0.0
    %1078 = vmatpush1.xpose.msra.mxu0 0.0
    %1079 = vmatprep.subr.mxu0 0.0
    %1080 = vmatpush1.xpose.msra.mxu0 0.0
    %1081 = vmatprep.subr.mxu0 0.0
    %1082 = vmatpush1.xpose.msra.mxu0 0.0
    %1083 = vmatprep.subr.mxu0 0.0
    %1084 = vmatpush1.xpose.msra.mxu0 %v1051
    %1085 = vmatprep.subr.mxu0 0.0
    %1086 = vmatpush2.xpose.msra.mxu0 0.0
    %1087 = vmatprep.subr.mxu0 0.0
    %1088 = vmatpush2.xpose.msra.mxu0 0.0
    %1089 = vmatprep.subr.mxu0 0.0
    %1090 = vmatpush2.xpose.msra.mxu0 0.0
    %1091 = vmatprep.subr.mxu0 0.0
    %1092 = vmatpush2.xpose.msra.mxu0 0.0
    %1093 = vmatprep.subr.mxu0 0.0
    %1094 = vmatpush2.xpose.msra.mxu0 0.0
    %1095 = vmatprep.subr.mxu0 0.0
    %1096 = vmatpush2.xpose.msra.mxu0 0.0
    %1097 = vmatprep.subr.mxu0 0.0
    %1098 = vmatpush2.xpose.msra.mxu0 0.0
    %1099 = vmatprep.subr.mxu0 0.0
    %1100 = vmatpush2.xpose.msra.mxu0 0.0
    %1101 = vmatprep.subr.mxu0 0.0
    %1102 = vmatpush2.xpose.msra.mxu0 0.0
    %1103 = vmatprep.subr.mxu0 0.0
    %1104 = vmatpush2.xpose.msra.mxu0 0.0
    %1105 = vmatprep.subr.mxu0 0.0
    %1106 = vmatpush2.xpose.msra.mxu0 0.0
    %1107 = vmatprep.subr.mxu0 0.0
    %1108 = vmatpush2.xpose.msra.mxu0 0.0
    %1109 = vmatprep.subr.mxu0 0.0
    %1110 = vmatpush2.xpose.msra.mxu0 0.0
    %1111 = vmatprep.subr.mxu0 0.0
    %1112 = vmatpush2.xpose.msra.mxu0 0.0
    %1113 = vmatprep.subr.mxu0 0.0
    %1114 = vmatpush2.xpose.msra.mxu0 0.0
    %1115 = vmatprep.subr.mxu0 0.0
    %1116 = vmatpush2.xpose.msra.mxu0 0.0
    %1117 = vmatprep.mubr.f32.mxu0 0.0
    %1118 = vmatmul.mubr.f32.gmra.mxu0 %v1049
    %v1119 = vpop.f32.mrf.mxu0
    %v1120 = vadd.f32 0.0, %v1119
    %v1121 = vpop.f32.mrf.mxu0
    %1122 = vdwg.mxu0
    %v1123 = vmul.f32 %v1042, 0.35355338
    %v1124 = vmul.f32 %v1120, 0.35355338
    %v1125 = vadd.f32 %v1123, %v47
    %v1126 = vadd.f32 %v1124, %v48
    %v1127 = vsel %vm202, %v1125, -inf
    %1128 = vmax.xlane.f32.xlu0 %v1127
    %v1129 = vpop.xlane.xlu0 %1128
    %v1130 = vsel %vm202, %v1126, -inf
    %1131 = vmax.xlane.f32.xlu0 %v1130
    %v1132 = vpop.xlane.xlu0 %1131
    %v1133 = vsub.f32 %v1125, %v1129
    %v1134 = vsub.f32 %v1126, %v1132
    %v1135 = vmul.f32 %v1133, 1.442695
    %v1136 = vpow.pop %v1135
    %v1137 = vmul.f32 %v1134, 1.442695
    %v1138 = vpow.pop %v1137
    %v1139 = vsel %vm202, %v1136, 0.0
    %1140 = vadd.xlane.f32.xlu0 %v1139
    %v1141 = vpop.xlane.xlu0 %1140
    %v1142 = vsel %vm202, %v1138, 0.0
    %1143 = vadd.xlane.f32.xlu0 %v1142
    %v1144 = vpop.xlane.xlu0 %1143
    %v1145 = vrcp.pop %v1141
    %v1146 = vrcp.pop %v1144
    %v1147 = vmul.f32 %v1136, %v1145
    %v1148 = vmul.f32 %v1138, %v1146
    %1149 = vrot.lane.b32.xlu0 %v143, 48
    %v1150 = vpop.permute.xlu0 %1149
    %v1153 = vsel %vm202, %v1147, 0
    %1155 = vmatprep.subr.mxu0 0.0
    %1156 = vmatpush1.msra.mxu0 0.0
    %1157 = vmatprep.subr.mxu0 0.0
    %1158 = vmatpush1.msra.mxu0 0.0
    %1159 = vmatprep.subr.mxu0 0.0
    %1160 = vmatpush1.msra.mxu0 0.0
    %1161 = vmatprep.subr.mxu0 0.0
    %1162 = vmatpush1.msra.mxu0 0.0
    %1163 = vmatprep.subr.mxu0 0.0
    %1164 = vmatpush1.msra.mxu0 0.0
    %1165 = vmatprep.subr.mxu0 0.0
    %1166 = vmatpush1.msra.mxu0 0.0
    %1167 = vmatprep.subr.mxu0 0.0
    %1168 = vmatpush1.msra.mxu0 0.0
    %1169 = vmatprep.subr.mxu0 0.0
    %1170 = vmatpush1.msra.mxu0 0.0
    %1171 = vmatprep.subr.mxu0 0.0
    %1172 = vmatpush1.msra.mxu0 0.0
    %1173 = vmatprep.subr.mxu0 0.0
    %1174 = vmatpush1.msra.mxu0 0.0
    %1175 = vmatprep.subr.mxu0 0.0
    %1176 = vmatpush1.msra.mxu0 0.0
    %1177 = vmatprep.subr.mxu0 0.0
    %1178 = vmatpush1.msra.mxu0 0.0
    %1179 = vmatprep.subr.mxu0 0.0
    %1180 = vmatpush1.msra.mxu0 0.0
    %1181 = vmatprep.subr.mxu0 0.0
    %1182 = vmatpush1.msra.mxu0 0.0
    %1183 = vmatprep.subr.mxu0 0.0
    %1184 = vmatpush1.msra.mxu0 0.0
    %1185 = vmatprep.subr.mxu0 0.0
    %1186 = vmatpush1.msra.mxu0 %v1150
    %1187 = vmatprep.subr.mxu0 0.0
    %1188 = vmatpush2.msra.mxu0 0.0
    %1189 = vmatprep.subr.mxu0 0.0
    %1190 = vmatpush2.msra.mxu0 0.0
    %1191 = vmatprep.subr.mxu0 0.0
    %1192 = vmatpush2.msra.mxu0 0.0
    %1193 = vmatprep.subr.mxu0 0.0
    %1194 = vmatpush2.msra.mxu0 0.0
    %1195 = vmatprep.subr.mxu0 0.0
    %1196 = vmatpush2.msra.mxu0 0.0
    %1197 = vmatprep.subr.mxu0 0.0
    %1198 = vmatpush2.msra.mxu0 0.0
    %1199 = vmatprep.subr.mxu0 0.0
    %1200 = vmatpush2.msra.mxu0 0.0
    %1201 = vmatprep.subr.mxu0 0.0
    %1202 = vmatpush2.msra.mxu0 0.0
    %1203 = vmatprep.subr.mxu0 0.0
    %1204 = vmatpush2.msra.mxu0 0.0
    %1205 = vmatprep.subr.mxu0 0.0
    %1206 = vmatpush2.msra.mxu0 0.0
    %1207 = vmatprep.subr.mxu0 0.0
    %1208 = vmatpush2.msra.mxu0 0.0
    %1209 = vmatprep.subr.mxu0 0.0
    %1210 = vmatpush2.msra.mxu0 0.0
    %1211 = vmatprep.subr.mxu0 0.0
    %1212 = vmatpush2.msra.mxu0 0.0
    %1213 = vmatprep.subr.mxu0 0.0
    %1214 = vmatpush2.msra.mxu0 0.0
    %1215 = vmatprep.subr.mxu0 0.0
    %1216 = vmatpush2.msra.mxu0 0.0
    %1217 = vmatprep.subr.mxu0 0.0
    %1218 = vmatpush2.msra.mxu0 0.0
    %1219 = vmatprep.mubr.f32.mxu0 0.0
    %1220 = vmatmul.mubr.f32.gmra.mxu0 %v1153
    %v1221 = vpop.f32.mrf.mxu0
    %v1222 = vadd.f32 0.0, %v1221
    %v1223 = vpop.f32.mrf.mxu0
    %1224 = vdwg.mxu0
    %1225 = vrot.lane.b32.xlu0 %v147, 48
    %v1226 = vpop.permute.xlu0 %1225
    %v1229 = vsel %vm202, %v1148, 0
    %1231 = vmatprep.subr.mxu0 0.0
    %1232 = vmatpush1.msra.mxu0 0.0
    %1233 = vmatprep.subr.mxu0 0.0
    %1234 = vmatpush1.msra.mxu0 0.0
    %1235 = vmatprep.subr.mxu0 0.0
    %1236 = vmatpush1.msra.mxu0 0.0
    %1237 = vmatprep.subr.mxu0 0.0
    %1238 = vmatpush1.msra.mxu0 0.0
    %1239 = vmatprep.subr.mxu0 0.0
    %1240 = vmatpush1.msra.mxu0 0.0
    %1241 = vmatprep.subr.mxu0 0.0
    %1242 = vmatpush1.msra.mxu0 0.0
    %1243 = vmatprep.subr.mxu0 0.0
    %1244 = vmatpush1.msra.mxu0 0.0
    %1245 = vmatprep.subr.mxu0 0.0
    %1246 = vmatpush1.msra.mxu0 0.0
    %1247 = vmatprep.subr.mxu0 0.0
    %1248 = vmatpush1.msra.mxu0 0.0
    %1249 = vmatprep.subr.mxu0 0.0
    %1250 = vmatpush1.msra.mxu0 0.0
    %1251 = vmatprep.subr.mxu0 0.0
    %1252 = vmatpush1.msra.mxu0 0.0
    %1253 = vmatprep.subr.mxu0 0.0
    %1254 = vmatpush1.msra.mxu0 0.0
    %1255 = vmatprep.subr.mxu0 0.0
    %1256 = vmatpush1.msra.mxu0 0.0
    %1257 = vmatprep.subr.mxu0 0.0
    %1258 = vmatpush1.msra.mxu0 0.0
    %1259 = vmatprep.subr.mxu0 0.0
    %1260 = vmatpush1.msra.mxu0 0.0
    %1261 = vmatprep.subr.mxu0 0.0
    %1262 = vmatpush1.msra.mxu0 %v1226
    %1263 = vmatprep.subr.mxu0 0.0
    %1264 = vmatpush2.msra.mxu0 0.0
    %1265 = vmatprep.subr.mxu0 0.0
    %1266 = vmatpush2.msra.mxu0 0.0
    %1267 = vmatprep.subr.mxu0 0.0
    %1268 = vmatpush2.msra.mxu0 0.0
    %1269 = vmatprep.subr.mxu0 0.0
    %1270 = vmatpush2.msra.mxu0 0.0
    %1271 = vmatprep.subr.mxu0 0.0
    %1272 = vmatpush2.msra.mxu0 0.0
    %1273 = vmatprep.subr.mxu0 0.0
    %1274 = vmatpush2.msra.mxu0 0.0
    %1275 = vmatprep.subr.mxu0 0.0
    %1276 = vmatpush2.msra.mxu0 0.0
    %1277 = vmatprep.subr.mxu0 0.0
    %1278 = vmatpush2.msra.mxu0 0.0
    %1279 = vmatprep.subr.mxu0 0.0
    %1280 = vmatpush2.msra.mxu0 0.0
    %1281 = vmatprep.subr.mxu0 0.0
    %1282 = vmatpush2.msra.mxu0 0.0
    %1283 = vmatprep.subr.mxu0 0.0
    %1284 = vmatpush2.msra.mxu0 0.0
    %1285 = vmatprep.subr.mxu0 0.0
    %1286 = vmatpush2.msra.mxu0 0.0
    %1287 = vmatprep.subr.mxu0 0.0
    %1288 = vmatpush2.msra.mxu0 0.0
    %1289 = vmatprep.subr.mxu0 0.0
    %1290 = vmatpush2.msra.mxu0 0.0
    %1291 = vmatprep.subr.mxu0 0.0
    %1292 = vmatpush2.msra.mxu0 0.0
    %1293 = vmatprep.subr.mxu0 0.0
    %1294 = vmatpush2.msra.mxu0 0.0
    %1295 = vmatprep.mubr.f32.mxu0 0.0
    %1296 = vmatmul.mubr.f32.gmra.mxu0 %v1229
    %v1297 = vpop.f32.mrf.mxu0
    %v1298 = vadd.f32 0.0, %v1297
    %v1299 = vpop.f32.mrf.mxu0
    %1300 = vdwg.mxu0
    %v1301 = vpack.c.bf16 %v1298, %v1222
    %v1303 = vsel %vm202, %v1301, 0
    %v1306 = vsel %vm875, %v197, 0
    %1308 = vmatprep.subr.bf16.mxu0 0
    %1309 = vmatpush1.bf16.msra.mxu0 0
    %1310 = vmatprep.subr.bf16.mxu0 0
    %1311 = vmatpush1.bf16.msra.mxu0 0
    %1312 = vmatprep.subr.bf16.mxu0 0
    %1313 = vmatpush1.bf16.msra.mxu0 0
    %1314 = vmatprep.subr.bf16.mxu0 0
    %1315 = vmatpush1.bf16.msra.mxu0 0
    %1316 = vmatprep.subr.bf16.mxu0 0
    %1317 = vmatpush1.bf16.msra.mxu0 0
    %1318 = vmatprep.subr.bf16.mxu0 0
    %1319 = vmatpush1.bf16.msra.mxu0 0
    %1320 = vmatprep.subr.bf16.mxu0 0
    %1321 = vmatpush1.bf16.msra.mxu0 0
    %1322 = vmatprep.subr.bf16.mxu0 0
    %1323 = vmatpush1.bf16.msra.mxu0 %v1306
    %1324 = vmatprep.subr.bf16.mxu0 0
    %1325 = vmatpush2.bf16.msra.mxu0 0
    %1326 = vmatprep.subr.bf16.mxu0 0
    %1327 = vmatpush2.bf16.msra.mxu0 0
    %1328 = vmatprep.subr.bf16.mxu0 0
    %1329 = vmatpush2.bf16.msra.mxu0 0
    %1330 = vmatprep.subr.bf16.mxu0 0
    %1331 = vmatpush2.bf16.msra.mxu0 0
    %1332 = vmatprep.subr.bf16.mxu0 0
    %1333 = vmatpush2.bf16.msra.mxu0 0
    %1334 = vmatprep.subr.bf16.mxu0 0
    %1335 = vmatpush2.bf16.msra.mxu0 0
    %1336 = vmatprep.subr.bf16.mxu0 0
    %1337 = vmatpush2.bf16.msra.mxu0 0
    %1338 = vmatprep.subr.bf16.mxu0 0
    %1339 = vmatpush2.bf16.msra.mxu0 0
    %1340 = vmatprep.mubr.bf16.mxu0 0
    %1341 = vmatmul.mubr.bf16.gmra.mxu0 %v1303
    %v1342 = vpop.f32.mrf.mxu0
    %v1343 = vadd.f32 0.0, %v1342
    %v1344 = vpop.f32.mrf.mxu0
    %v1345 = vpop.f32.mrf.mxu0
    %v1346 = vadd.f32 0.0, %v1345
    %v1347 = vpop.f32.mrf.mxu0
    %1348 = vdwg.mxu0
    %v1349 = vadd.f32 %v961, %v1343
    %v1350 = vadd.f32 %v964, %v1346
    %1351 = vrot.lane.b32.xlu0 %v171, 104
    %v1352 = vpop.permute.xlu0 %1351
    %1353 = vrot.lane.b32.xlu0 %v193, 72
    %v1354 = vpop.permute.xlu0 %1353
    %v1355 = vsel %vm202, %v1352, 0
    %v1357 = vsel %vm202, %v1354, 0
    %1359 = vmatprep.subr.mxu0 0.0
    %1360 = vmatpush1.xpose.msra.mxu0 0.0
    %1361 = vmatprep.subr.mxu0 0.0
    %1362 = vmatpush1.xpose.msra.mxu0 0.0
    %1363 = vmatprep.subr.mxu0 0.0
    %1364 = vmatpush1.xpose.msra.mxu0 0.0
    %1365 = vmatprep.subr.mxu0 0.0
    %1366 = vmatpush1.xpose.msra.mxu0 0.0
    %1367 = vmatprep.subr.mxu0 0.0
    %1368 = vmatpush1.xpose.msra.mxu0 0.0
    %1369 = vmatprep.subr.mxu0 0.0
    %1370 = vmatpush1.xpose.msra.mxu0 0.0
    %1371 = vmatprep.subr.mxu0 0.0
    %1372 = vmatpush1.xpose.msra.mxu0 0.0
    %1373 = vmatprep.subr.mxu0 0.0
    %1374 = vmatpush1.xpose.msra.mxu0 0.0
    %1375 = vmatprep.subr.mxu0 0.0
    %1376 = vmatpush1.xpose.msra.mxu0 0.0
    %1377 = vmatprep.subr.mxu0 0.0
    %1378 = vmatpush1.xpose.msra.mxu0 0.0
    %1379 = vmatprep.subr.mxu0 0.0
    %1380 = vmatpush1.xpose.msra.mxu0 0.0
    %1381 = vmatprep.subr.mxu0 0.0
    %1382 = vmatpush1.xpose.msra.mxu0 0.0
    %1383 = vmatprep.subr.mxu0 0.0
    %1384 = vmatpush1.xpose.msra.mxu0 0.0
    %1385 = vmatprep.subr.mxu0 0.0
    %1386 = vmatpush1.xpose.msra.mxu0 0.0
    %1387 = vmatprep.subr.mxu0 0.0
    %1388 = vmatpush1.xpose.msra.mxu0 0.0
    %1389 = vmatprep.subr.mxu0 0.0
    %1390 = vmatpush1.xpose.msra.mxu0 %v1357
    %1391 = vmatprep.subr.mxu0 0.0
    %1392 = vmatpush2.xpose.msra.mxu0 0.0
    %1393 = vmatprep.subr.mxu0 0.0
    %1394 = vmatpush2.xpose.msra.mxu0 0.0
    %1395 = vmatprep.subr.mxu0 0.0
    %1396 = vmatpush2.xpose.msra.mxu0 0.0
    %1397 = vmatprep.subr.mxu0 0.0
    %1398 = vmatpush2.xpose.msra.mxu0 0.0
    %1399 = vmatprep.subr.mxu0 0.0
    %1400 = vmatpush2.xpose.msra.mxu0 0.0
    %1401 = vmatprep.subr.mxu0 0.0
    %1402 = vmatpush2.xpose.msra.mxu0 0.0
    %1403 = vmatprep.subr.mxu0 0.0
    %1404 = vmatpush2.xpose.msra.mxu0 0.0
    %1405 = vmatprep.subr.mxu0 0.0
    %1406 = vmatpush2.xpose.msra.mxu0 0.0
    %1407 = vmatprep.subr.mxu0 0.0
    %1408 = vmatpush2.xpose.msra.mxu0 0.0
    %1409 = vmatprep.subr.mxu0 0.0
    %1410 = vmatpush2.xpose.msra.mxu0 0.0
    %1411 = vmatprep.subr.mxu0 0.0
    %1412 = vmatpush2.xpose.msra.mxu0 0.0
    %1413 = vmatprep.subr.mxu0 0.0
    %1414 = vmatpush2.xpose.msra.mxu0 0.0
    %1415 = vmatprep.subr.mxu0 0.0
    %1416 = vmatpush2.xpose.msra.mxu0 0.0
    %1417 = vmatprep.subr.mxu0 0.0
    %1418 = vmatpush2.xpose.msra.mxu0 0.0
    %1419 = vmatprep.subr.mxu0 0.0
    %1420 = vmatpush2.xpose.msra.mxu0 0.0
    %1421 = vmatprep.subr.mxu0 0.0
    %1422 = vmatpush2.xpose.msra.mxu0 0.0
    %1423 = vmatprep.mubr.f32.mxu0 0.0
    %1424 = vmatmul.mubr.f32.gmra.mxu0 %v1355
    %v1425 = vpop.f32.mrf.mxu0
    %v1426 = vadd.f32 0.0, %v1425
    %v1427 = vpop.f32.mrf.mxu0
    %1428 = vdwg.mxu0
    %1429 = vrot.lane.b32.xlu0 %v172, 104
    %v1430 = vpop.permute.xlu0 %1429
    %1431 = vrot.lane.b32.xlu0 %v194, 72
    %v1432 = vpop.permute.xlu0 %1431
    %v1433 = vsel %vm202, %v1430, 0
    %v1435 = vsel %vm202, %v1432, 0
    %1437 = vmatprep.subr.mxu0 0.0
    %1438 = vmatpush1.xpose.msra.mxu0 0.0
    %1439 = vmatprep.subr.mxu0 0.0
    %1440 = vmatpush1.xpose.msra.mxu0 0.0
    %1441 = vmatprep.subr.mxu0 0.0
    %1442 = vmatpush1.xpose.msra.mxu0 0.0
    %1443 = vmatprep.subr.mxu0 0.0
    %1444 = vmatpush1.xpose.msra.mxu0 0.0
    %1445 = vmatprep.subr.mxu0 0.0
    %1446 = vmatpush1.xpose.msra.mxu0 0.0
    %1447 = vmatprep.subr.mxu0 0.0
    %1448 = vmatpush1.xpose.msra.mxu0 0.0
    %1449 = vmatprep.subr.mxu0 0.0
    %1450 = vmatpush1.xpose.msra.mxu0 0.0
    %1451 = vmatprep.subr.mxu0 0.0
    %1452 = vmatpush1.xpose.msra.mxu0 0.0
    %1453 = vmatprep.subr.mxu0 0.0
    %1454 = vmatpush1.xpose.msra.mxu0 0.0
    %1455 = vmatprep.subr.mxu0 0.0
    %1456 = vmatpush1.xpose.msra.mxu0 0.0
    %1457 = vmatprep.subr.mxu0 0.0
    %1458 = vmatpush1.xpose.msra.mxu0 0.0
    %1459 = vmatprep.subr.mxu0 0.0
    %1460 = vmatpush1.xpose.msra.mxu0 0.0
    %1461 = vmatprep.subr.mxu0 0.0
    %1462 = vmatpush1.xpose.msra.mxu0 0.0
    %1463 = vmatprep.subr.mxu0 0.0
    %1464 = vmatpush1.xpose.msra.mxu0 0.0
    %1465 = vmatprep.subr.mxu0 0.0
    %1466 = vmatpush1.xpose.msra.mxu0 0.0
    %1467 = vmatprep.subr.mxu0 0.0
    %1468 = vmatpush1.xpose.msra.mxu0 %v1435
    %1469 = vmatprep.subr.mxu0 0.0
    %1470 = vmatpush2.xpose.msra.mxu0 0.0
    %1471 = vmatprep.subr.mxu0 0.0
    %1472 = vmatpush2.xpose.msra.mxu0 0.0
    %1473 = vmatprep.subr.mxu0 0.0
    %1474 = vmatpush2.xpose.msra.mxu0 0.0
    %1475 = vmatprep.subr.mxu0 0.0
    %1476 = vmatpush2.xpose.msra.mxu0 0.0
    %1477 = vmatprep.subr.mxu0 0.0
    %1478 = vmatpush2.xpose.msra.mxu0 0.0
    %1479 = vmatprep.subr.mxu0 0.0
    %1480 = vmatpush2.xpose.msra.mxu0 0.0
    %1481 = vmatprep.subr.mxu0 0.0
    %1482 = vmatpush2.xpose.msra.mxu0 0.0
    %1483 = vmatprep.subr.mxu0 0.0
    %1484 = vmatpush2.xpose.msra.mxu0 0.0
    %1485 = vmatprep.subr.mxu0 0.0
    %1486 = vmatpush2.xpose.msra.mxu0 0.0
    %1487 = vmatprep.subr.mxu0 0.0
    %1488 = vmatpush2.xpose.msra.mxu0 0.0
    %1489 = vmatprep.subr.mxu0 0.0
    %1490 = vmatpush2.xpose.msra.mxu0 0.0
    %1491 = vmatprep.subr.mxu0 0.0
    %1492 = vmatpush2.xpose.msra.mxu0 0.0
    %1493 = vmatprep.subr.mxu0 0.0
    %1494 = vmatpush2.xpose.msra.mxu0 0.0
    %1495 = vmatprep.subr.mxu0 0.0
    %1496 = vmatpush2.xpose.msra.mxu0 0.0
    %1497 = vmatprep.subr.mxu0 0.0
    %1498 = vmatpush2.xpose.msra.mxu0 0.0
    %1499 = vmatprep.subr.mxu0 0.0
    %1500 = vmatpush2.xpose.msra.mxu0 0.0
    %1501 = vmatprep.mubr.f32.mxu0 0.0
    %1502 = vmatmul.mubr.f32.gmra.mxu0 %v1433
    %v1503 = vpop.f32.mrf.mxu0
    %v1504 = vadd.f32 0.0, %v1503
    %v1505 = vpop.f32.mrf.mxu0
    %1506 = vdwg.mxu0
    %v1507 = vmul.f32 %v1426, 0.35355338
    %v1508 = vmul.f32 %v1504, 0.35355338
    %v1509 = vadd.f32 %v1507, %v47
    %v1510 = vadd.f32 %v1508, %v48
    %v1511 = vsel %vm202, %v1509, -inf
    %1512 = vmax.xlane.f32.xlu0 %v1511
    %v1513 = vpop.xlane.xlu0 %1512
    %v1514 = vsel %vm202, %v1510, -inf
    %1515 = vmax.xlane.f32.xlu0 %v1514
    %v1516 = vpop.xlane.xlu0 %1515
    %v1517 = vsub.f32 %v1509, %v1513
    %v1518 = vsub.f32 %v1510, %v1516
    %v1519 = vmul.f32 %v1517, 1.442695
    %v1520 = vpow.pop %v1519
    %v1521 = vmul.f32 %v1518, 1.442695
    %v1522 = vpow.pop %v1521
    %v1523 = vsel %vm202, %v1520, 0.0
    %1524 = vadd.xlane.f32.xlu0 %v1523
    %v1525 = vpop.xlane.xlu0 %1524
    %v1526 = vsel %vm202, %v1522, 0.0
    %1527 = vadd.xlane.f32.xlu0 %v1526
    %v1528 = vpop.xlane.xlu0 %1527
    %v1529 = vrcp.pop %v1525
    %v1530 = vrcp.pop %v1528
    %v1531 = vmul.f32 %v1520, %v1529
    %v1532 = vmul.f32 %v1522, %v1530
    %1533 = vrot.lane.b32.xlu0 %v143, 40
    %v1534 = vpop.permute.xlu0 %1533
    %v1537 = vsel %vm202, %v1531, 0
    %1539 = vmatprep.subr.mxu0 0.0
    %1540 = vmatpush1.msra.mxu0 0.0
    %1541 = vmatprep.subr.mxu0 0.0
    %1542 = vmatpush1.msra.mxu0 0.0
    %1543 = vmatprep.subr.mxu0 0.0
    %1544 = vmatpush1.msra.mxu0 0.0
    %1545 = vmatprep.subr.mxu0 0.0
    %1546 = vmatpush1.msra.mxu0 0.0
    %1547 = vmatprep.subr.mxu0 0.0
    %1548 = vmatpush1.msra.mxu0 0.0
    %1549 = vmatprep.subr.mxu0 0.0
    %1550 = vmatpush1.msra.mxu0 0.0
    %1551 = vmatprep.subr.mxu0 0.0
    %1552 = vmatpush1.msra.mxu0 0.0
    %1553 = vmatprep.subr.mxu0 0.0
    %1554 = vmatpush1.msra.mxu0 0.0
    %1555 = vmatprep.subr.mxu0 0.0
    %1556 = vmatpush1.msra.mxu0 0.0
    %1557 = vmatprep.subr.mxu0 0.0
    %1558 = vmatpush1.msra.mxu0 0.0
    %1559 = vmatprep.subr.mxu0 0.0
    %1560 = vmatpush1.msra.mxu0 0.0
    %1561 = vmatprep.subr.mxu0 0.0
    %1562 = vmatpush1.msra.mxu0 0.0
    %1563 = vmatprep.subr.mxu0 0.0
    %1564 = vmatpush1.msra.mxu0 0.0
    %1565 = vmatprep.subr.mxu0 0.0
    %1566 = vmatpush1.msra.mxu0 0.0
    %1567 = vmatprep.subr.mxu0 0.0
    %1568 = vmatpush1.msra.mxu0 0.0
    %1569 = vmatprep.subr.mxu0 0.0
    %1570 = vmatpush1.msra.mxu0 %v1534
    %1571 = vmatprep.subr.mxu0 0.0
    %1572 = vmatpush2.msra.mxu0 0.0
    %1573 = vmatprep.subr.mxu0 0.0
    %1574 = vmatpush2.msra.mxu0 0.0
    %1575 = vmatprep.subr.mxu0 0.0
    %1576 = vmatpush2.msra.mxu0 0.0
    %1577 = vmatprep.subr.mxu0 0.0
    %1578 = vmatpush2.msra.mxu0 0.0
    %1579 = vmatprep.subr.mxu0 0.0
    %1580 = vmatpush2.msra.mxu0 0.0
    %1581 = vmatprep.subr.mxu0 0.0
    %1582 = vmatpush2.msra.mxu0 0.0
    %1583 = vmatprep.subr.mxu0 0.0
    %1584 = vmatpush2.msra.mxu0 0.0
    %1585 = vmatprep.subr.mxu0 0.0
    %1586 = vmatpush2.msra.mxu0 0.0
    %1587 = vmatprep.subr.mxu0 0.0
    %1588 = vmatpush2.msra.mxu0 0.0
    %1589 = vmatprep.subr.mxu0 0.0
    %1590 = vmatpush2.msra.mxu0 0.0
    %1591 = vmatprep.subr.mxu0 0.0
    %1592 = vmatpush2.msra.mxu0 0.0
    %1593 = vmatprep.subr.mxu0 0.0
    %1594 = vmatpush2.msra.mxu0 0.0
    %1595 = vmatprep.subr.mxu0 0.0
    %1596 = vmatpush2.msra.mxu0 0.0
    %1597 = vmatprep.subr.mxu0 0.0
    %1598 = vmatpush2.msra.mxu0 0.0
    %1599 = vmatprep.subr.mxu0 0.0
    %1600 = vmatpush2.msra.mxu0 0.0
    %1601 = vmatprep.subr.mxu0 0.0
    %1602 = vmatpush2.msra.mxu0 0.0
    %1603 = vmatprep.mubr.f32.mxu0 0.0
    %1604 = vmatmul.mubr.f32.gmra.mxu0 %v1537
    %v1605 = vpop.f32.mrf.mxu0
    %v1606 = vadd.f32 0.0, %v1605
    %v1607 = vpop.f32.mrf.mxu0
    %1608 = vdwg.mxu0
    %1609 = vrot.lane.b32.xlu0 %v147, 40
    %v1610 = vpop.permute.xlu0 %1609
    %v1613 = vsel %vm202, %v1532, 0
    %1615 = vmatprep.subr.mxu0 0.0
    %1616 = vmatpush1.msra.mxu0 0.0
    %1617 = vmatprep.subr.mxu0 0.0
    %1618 = vmatpush1.msra.mxu0 0.0
    %1619 = vmatprep.subr.mxu0 0.0
    %1620 = vmatpush1.msra.mxu0 0.0
    %1621 = vmatprep.subr.mxu0 0.0
    %1622 = vmatpush1.msra.mxu0 0.0
    %1623 = vmatprep.subr.mxu0 0.0
    %1624 = vmatpush1.msra.mxu0 0.0
    %1625 = vmatprep.subr.mxu0 0.0
    %1626 = vmatpush1.msra.mxu0 0.0
    %1627 = vmatprep.subr.mxu0 0.0
    %1628 = vmatpush1.msra.mxu0 0.0
    %1629 = vmatprep.subr.mxu0 0.0
    %1630 = vmatpush1.msra.mxu0 0.0
    %1631 = vmatprep.subr.mxu0 0.0
    %1632 = vmatpush1.msra.mxu0 0.0
    %1633 = vmatprep.subr.mxu0 0.0
    %1634 = vmatpush1.msra.mxu0 0.0
    %1635 = vmatprep.subr.mxu0 0.0
    %1636 = vmatpush1.msra.mxu0 0.0
    %1637 = vmatprep.subr.mxu0 0.0
    %1638 = vmatpush1.msra.mxu0 0.0
    %1639 = vmatprep.subr.mxu0 0.0
    %1640 = vmatpush1.msra.mxu0 0.0
    %1641 = vmatprep.subr.mxu0 0.0
    %1642 = vmatpush1.msra.mxu0 0.0
    %1643 = vmatprep.subr.mxu0 0.0
    %1644 = vmatpush1.msra.mxu0 0.0
    %1645 = vmatprep.subr.mxu0 0.0
    %1646 = vmatpush1.msra.mxu0 %v1610
    %1647 = vmatprep.subr.mxu0 0.0
    %1648 = vmatpush2.msra.mxu0 0.0
    %1649 = vmatprep.subr.mxu0 0.0
    %1650 = vmatpush2.msra.mxu0 0.0
    %1651 = vmatprep.subr.mxu0 0.0
    %1652 = vmatpush2.msra.mxu0 0.0
    %1653 = vmatprep.subr.mxu0 0.0
    %1654 = vmatpush2.msra.mxu0 0.0
    %1655 = vmatprep.subr.mxu0 0.0
    %1656 = vmatpush2.msra.mxu0 0.0
    %1657 = vmatprep.subr.mxu0 0.0
    %1658 = vmatpush2.msra.mxu0 0.0
    %1659 = vmatprep.subr.mxu0 0.0
    %1660 = vmatpush2.msra.mxu0 0.0
    %1661 = vmatprep.subr.mxu0 0.0
    %1662 = vmatpush2.msra.mxu0 0.0
    %1663 = vmatprep.subr.mxu0 0.0
    %1664 = vmatpush2.msra.mxu0 0.0
    %1665 = vmatprep.subr.mxu0 0.0
    %1666 = vmatpush2.msra.mxu0 0.0
    %1667 = vmatprep.subr.mxu0 0.0
    %1668 = vmatpush2.msra.mxu0 0.0
    %1669 = vmatprep.subr.mxu0 0.0
    %1670 = vmatpush2.msra.mxu0 0.0
    %1671 = vmatprep.subr.mxu0 0.0
    %1672 = vmatpush2.msra.mxu0 0.0
    %1673 = vmatprep.subr.mxu0 0.0
    %1674 = vmatpush2.msra.mxu0 0.0
    %1675 = vmatprep.subr.mxu0 0.0
    %1676 = vmatpush2.msra.mxu0 0.0
    %1677 = vmatprep.subr.mxu0 0.0
    %1678 = vmatpush2.msra.mxu0 0.0
    %1679 = vmatprep.mubr.f32.mxu0 0.0
    %1680 = vmatmul.mubr.f32.gmra.mxu0 %v1613
    %v1681 = vpop.f32.mrf.mxu0
    %v1682 = vadd.f32 0.0, %v1681
    %v1683 = vpop.f32.mrf.mxu0
    %1684 = vdwg.mxu0
    %v1685 = vpack.c.bf16 %v1682, %v1606
    %v1687 = vsel %vm202, %v1685, 0
    %v1690 = vsel %vm875, %v198, 0
    %1692 = vmatprep.subr.bf16.mxu0 0
    %1693 = vmatpush1.bf16.msra.mxu0 0
    %1694 = vmatprep.subr.bf16.mxu0 0
    %1695 = vmatpush1.bf16.msra.mxu0 0
    %1696 = vmatprep.subr.bf16.mxu0 0
    %1697 = vmatpush1.bf16.msra.mxu0 0
    %1698 = vmatprep.subr.bf16.mxu0 0
    %1699 = vmatpush1.bf16.msra.mxu0 0
    %1700 = vmatprep.subr.bf16.mxu0 0
    %1701 = vmatpush1.bf16.msra.mxu0 0
    %1702 = vmatprep.subr.bf16.mxu0 0
    %1703 = vmatpush1.bf16.msra.mxu0 0
    %1704 = vmatprep.subr.bf16.mxu0 0
    %1705 = vmatpush1.bf16.msra.mxu0 0
    %1706 = vmatprep.subr.bf16.mxu0 0
    %1707 = vmatpush1.bf16.msra.mxu0 %v1690
    %1708 = vmatprep.subr.bf16.mxu0 0
    %1709 = vmatpush2.bf16.msra.mxu0 0
    %1710 = vmatprep.subr.bf16.mxu0 0
    %1711 = vmatpush2.bf16.msra.mxu0 0
    %1712 = vmatprep.subr.bf16.mxu0 0
    %1713 = vmatpush2.bf16.msra.mxu0 0
    %1714 = vmatprep.subr.bf16.mxu0 0
    %1715 = vmatpush2.bf16.msra.mxu0 0
    %1716 = vmatprep.subr.bf16.mxu0 0
    %1717 = vmatpush2.bf16.msra.mxu0 0
    %1718 = vmatprep.subr.bf16.mxu0 0
    %1719 = vmatpush2.bf16.msra.mxu0 0
    %1720 = vmatprep.subr.bf16.mxu0 0
    %1721 = vmatpush2.bf16.msra.mxu0 0
    %1722 = vmatprep.subr.bf16.mxu0 0
    %1723 = vmatpush2.bf16.msra.mxu0 0
    %1724 = vmatprep.mubr.bf16.mxu0 0
    %1725 = vmatmul.mubr.bf16.gmra.mxu0 %v1687
    %v1726 = vpop.f32.mrf.mxu0
    %v1727 = vadd.f32 0.0, %v1726
    %v1728 = vpop.f32.mrf.mxu0
    %v1729 = vpop.f32.mrf.mxu0
    %v1730 = vadd.f32 0.0, %v1729
    %v1731 = vpop.f32.mrf.mxu0
    %1732 = vdwg.mxu0
    %v1733 = vadd.f32 %v1349, %v1727
    %v1734 = vadd.f32 %v1350, %v1730
    %v1735 = vadd.f32 %v45, %v1733
    %v1736 = vadd.f32 %v46, %v1734
    %v1737 = vmul.f32 %v1735, %v1735
    %v1738 = vmul.f32 %v1736, %v1736
    %v1739 = vsel %vm56, %v1737, 0.0
    %1740 = vadd.xlane.f32.xlu0 %v1739
    %v1741 = vpop.xlane.xlu0 %1740
    %v1742 = vsel %vm56, %v1738, 0.0
    %1743 = vadd.xlane.f32.xlu0 %v1742
    %v1744 = vpop.xlane.xlu0 %1743
    %v1745 = vmul.f32 %v1741, %v63
    %v1746 = vmul.f32 %v1744, %v63
    %v1747 = vadd.f32 %v1745, 1e-06
    %v1748 = vadd.f32 %v1746, 1e-06
    %v1749 = vrsqrt.pop %v1747
    %v1750 = vrsqrt.pop %v1748
    %v1751 = vmul.f32 %v1735, %v1749
    %v1752 = vmul.f32 %v1736, %v1750
    %v1753 = vld [vmem:[%s3 + $0x1] sm:$0x1]
    %v1754 = vadd.f32 %v1753, 1.0
    %v1755 = vlaneseq
    %v1756 = vshrl.u32 %v1755, 7
    %v1757 = vsub.s32 0, %v1756
    %v1758 = vrot.slane %v1754, %v1757
    %v1759 = vmul.f32 %v1751, %v1758
    %v1760 = vmul.f32 %v1752, %v1758
    %v1761 = vpack.c.bf16 %v1760, %v1759
    %v1762 = vld [vmem:[%s6] sm:$0xff]
    %v1763 = vld [vmem:[%s6 + $0x8] sm:$0xff]
    %v1764 = vld [vmem:[%s6 + $0x10] sm:$0xff]
    %v1765 = vld [vmem:[%s6 + $0x18] sm:$0xff]
    %v1766 = vld [vmem:[%s6 + $0x20] sm:$0xff]
    %v1767 = vld [vmem:[%s6 + $0x28] sm:$0xff]
    %v1768 = vld [vmem:[%s6 + $0x30] sm:$0xff]
    %v1769 = vld [vmem:[%s6 + $0x38] sm:$0xff]
    %v1778 = vunpack.c.l.b16 %v1762
    %v1779 = vunpack.c.h.b16 %v1762
    %v1780 = vunpack.c.l.b16 %v1763
    %v1781 = vunpack.c.h.b16 %v1763
    %v1782 = vunpack.c.l.b16 %v1764
    %v1783 = vunpack.c.h.b16 %v1764
    %v1784 = vunpack.c.l.b16 %v1765
    %v1785 = vunpack.c.h.b16 %v1765
    %v1786 = vunpack.c.l.b16 %v1766
    %v1787 = vunpack.c.h.b16 %v1766
    %v1788 = vunpack.c.l.b16 %v1767
    %v1789 = vunpack.c.h.b16 %v1767
    %v1790 = vunpack.c.l.b16 %v1768
    %v1791 = vunpack.c.h.b16 %v1768
    %v1792 = vunpack.c.l.b16 %v1769
    %v1793 = vunpack.c.h.b16 %v1769
    %v1794 = vpack.c.b16 %v1782, %v1778
    %v1795 = vpack.c.b16 %v1783, %v1779
    %v1796 = vpack.c.b16 %v1784, %v1780
    %v1797 = vpack.c.b16 %v1785, %v1781
    %v1798 = vpack.c.b16 %v1790, %v1786
    %v1799 = vpack.c.b16 %v1791, %v1787
    %v1800 = vpack.c.b16 %v1792, %v1788
    %v1801 = vpack.c.b16 %v1793, %v1789
    %v1811 = vsel %vm56, %v1761, 0
    %1813 = vmatprep.subr.bf16.mxu0 0
    %1814 = vmatpush1.bf16.msra.mxu0 0
    %1815 = vmatprep.subr.bf16.mxu0 0
    %1816 = vmatpush1.bf16.msra.mxu0 0
    %1817 = vmatprep.subr.bf16.mxu0 0
    %1818 = vmatpush1.bf16.msra.mxu0 0
    %1819 = vmatprep.subr.bf16.mxu0 0
    %1820 = vmatpush1.bf16.msra.mxu0 0
    %1821 = vmatprep.subr.bf16.mxu0 0
    %1822 = vmatpush1.bf16.msra.mxu0 0
    %1823 = vmatprep.subr.bf16.mxu0 0
    %1824 = vmatpush1.bf16.msra.mxu0 0
    %1825 = vmatprep.subr.bf16.mxu0 %v1799
    %1826 = vmatpush1.bf16.msra.mxu0 %v1798
    %1827 = vmatprep.subr.bf16.mxu0 %v1795
    %1828 = vmatpush1.bf16.msra.mxu0 %v1794
    %1829 = vmatprep.subr.bf16.mxu0 0
    %1830 = vmatpush2.bf16.msra.mxu0 0
    %1831 = vmatprep.subr.bf16.mxu0 0
    %1832 = vmatpush2.bf16.msra.mxu0 0
    %1833 = vmatprep.subr.bf16.mxu0 0
    %1834 = vmatpush2.bf16.msra.mxu0 0
    %1835 = vmatprep.subr.bf16.mxu0 0
    %1836 = vmatpush2.bf16.msra.mxu0 0
    %1837 = vmatprep.subr.bf16.mxu0 0
    %1838 = vmatpush2.bf16.msra.mxu0 0
    %1839 = vmatprep.subr.bf16.mxu0 0
    %1840 = vmatpush2.bf16.msra.mxu0 0
    %1841 = vmatprep.subr.bf16.mxu0 0
    %1842 = vmatpush2.bf16.msra.mxu0 0
    %1843 = vmatprep.subr.bf16.mxu0 0
    %1844 = vmatpush2.bf16.msra.mxu0 0
    %1845 = vmatprep.mubr.bf16.mxu0 0
    %1846 = vmatmul.mubr.bf16.gmra.mxu0 %v1811
    %v1847 = vpop.f32.mrf.mxu0
    %v1848 = vadd.f32 0.0, %v1847
    %v1849 = vpop.f32.mrf.mxu0
    %v1850 = vadd.f32 0.0, %v1849
    %v1851 = vpop.f32.mrf.mxu0
    %v1852 = vadd.f32 0.0, %v1851
    %v1853 = vpop.f32.mrf.mxu0
    %v1854 = vadd.f32 0.0, %v1853
    %1855 = vdwg.mxu0
    %1856 = vmatprep.subr.bf16.mxu0 0
    %1857 = vmatpush1.bf16.msra.mxu0 0
    %1858 = vmatprep.subr.bf16.mxu0 0
    %1859 = vmatpush1.bf16.msra.mxu0 0
    %1860 = vmatprep.subr.bf16.mxu0 0
    %1861 = vmatpush1.bf16.msra.mxu0 0
    %1862 = vmatprep.subr.bf16.mxu0 0
    %1863 = vmatpush1.bf16.msra.mxu0 0
    %1864 = vmatprep.subr.bf16.mxu0 0
    %1865 = vmatpush1.bf16.msra.mxu0 0
    %1866 = vmatprep.subr.bf16.mxu0 0
    %1867 = vmatpush1.bf16.msra.mxu0 0
    %1868 = vmatprep.subr.bf16.mxu0 %v1801
    %1869 = vmatpush1.bf16.msra.mxu0 %v1800
    %1870 = vmatprep.subr.bf16.mxu0 %v1797
    %1871 = vmatpush1.bf16.msra.mxu0 %v1796
    %1872 = vmatprep.subr.bf16.mxu0 0
    %1873 = vmatpush2.bf16.msra.mxu0 0
    %1874 = vmatprep.subr.bf16.mxu0 0
    %1875 = vmatpush2.bf16.msra.mxu0 0
    %1876 = vmatprep.subr.bf16.mxu0 0
    %1877 = vmatpush2.bf16.msra.mxu0 0
    %1878 = vmatprep.subr.bf16.mxu0 0
    %1879 = vmatpush2.bf16.msra.mxu0 0
    %1880 = vmatprep.subr.bf16.mxu0 0
    %1881 = vmatpush2.bf16.msra.mxu0 0
    %1882 = vmatprep.subr.bf16.mxu0 0
    %1883 = vmatpush2.bf16.msra.mxu0 0
    %1884 = vmatprep.subr.bf16.mxu0 0
    %1885 = vmatpush2.bf16.msra.mxu0 0
    %1886 = vmatprep.subr.bf16.mxu0 0
    %1887 = vmatpush2.bf16.msra.mxu0 0
    %1888 = vmatprep.mubr.bf16.mxu0 0
    %1889 = vmatmul.mubr.bf16.gmra.mxu0 %v1811
    %v1890 = vpop.f32.mrf.mxu0
    %v1891 = vadd.f32 0.0, %v1890
    %v1892 = vpop.f32.mrf.mxu0
    %v1893 = vadd.f32 0.0, %v1892
    %v1894 = vpop.f32.mrf.mxu0
    %v1895 = vadd.f32 0.0, %v1894
    %v1896 = vpop.f32.mrf.mxu0
    %v1897 = vadd.f32 0.0, %v1896
    %1898 = vdwg.mxu0
    %v1899 = vmul.f32 %v1848, 0.5
    %v1900 = vmul.f32 %v1850, 0.5
    %v1901 = vmul.f32 %v1852, 0.5
    %v1902 = vmul.f32 %v1854, 0.5
    %v1903 = vmul.f32 %v1848, 0.044715
    %v1904 = vmul.f32 %v1850, 0.044715
    %v1905 = vmul.f32 %v1852, 0.044715
    %v1906 = vmul.f32 %v1854, 0.044715
    %v1907 = vmul.f32 %v1903, %v1848
    %v1908 = vmul.f32 %v1904, %v1850
    %v1909 = vmul.f32 %v1905, %v1852
    %v1910 = vmul.f32 %v1906, %v1854
    %v1911 = vmul.f32 %v1907, %v1848
    %v1912 = vmul.f32 %v1908, %v1850
    %v1913 = vmul.f32 %v1909, %v1852
    %v1914 = vmul.f32 %v1910, %v1854
    %v1915 = vadd.f32 %v1848, %v1911
    %v1916 = vadd.f32 %v1850, %v1912
    %v1917 = vadd.f32 %v1852, %v1913
    %v1918 = vadd.f32 %v1854, %v1914
    %v1919 = vmul.f32 %v1915, 0.7978846
    %v1920 = vmul.f32 %v1916, 0.7978846
    %v1921 = vmul.f32 %v1917, 0.7978846
    %v1922 = vmul.f32 %v1918, 0.7978846
    %v1923 = vtanh.pop %v1919
    %v1924 = vtanh.pop %v1920
    %v1925 = vtanh.pop %v1921
    %v1926 = vtanh.pop %v1922
    %v1927 = vadd.f32 %v1923, 1.0
    %v1928 = vadd.f32 %v1924, 1.0
    %v1929 = vadd.f32 %v1925, 1.0
    %v1930 = vadd.f32 %v1926, 1.0
    %v1931 = vmul.f32 %v1899, %v1927
    %v1932 = vmul.f32 %v1900, %v1928
    %v1933 = vmul.f32 %v1901, %v1929
    %v1934 = vmul.f32 %v1902, %v1930
    %v1935 = vmul.f32 %v1931, %v1891
    %v1936 = vmul.f32 %v1932, %v1893
    %v1937 = vmul.f32 %v1933, %v1895
    %v1938 = vmul.f32 %v1934, %v1897
    %v1939 = vpack.c.bf16 %v1937, %v1935
    %v1940 = vpack.c.bf16 %v1938, %v1936
    %v1941 = vld [vmem:[%s7] sm:$0xf]
    %v1942 = vld [vmem:[%s7 + $0x4] sm:$0xf]
    %v1943 = vld [vmem:[%s7 + $0x8] sm:$0xf]
    %v1944 = vld [vmem:[%s7 + $0xc] sm:$0xf]
    %v1945 = vld [vmem:[%s7 + $0x10] sm:$0xf]
    %v1946 = vld [vmem:[%s7 + $0x14] sm:$0xf]
    %v1947 = vld [vmem:[%s7 + $0x18] sm:$0xf]
    %v1948 = vld [vmem:[%s7 + $0x1c] sm:$0xf]
    %v1949 = vld [vmem:[%s7 + $0x20] sm:$0xf]
    %v1950 = vld [vmem:[%s7 + $0x24] sm:$0xf]
    %v1951 = vld [vmem:[%s7 + $0x28] sm:$0xf]
    %v1952 = vld [vmem:[%s7 + $0x2c] sm:$0xf]
    %v1953 = vld [vmem:[%s7 + $0x30] sm:$0xf]
    %v1954 = vld [vmem:[%s7 + $0x34] sm:$0xf]
    %v1955 = vld [vmem:[%s7 + $0x38] sm:$0xf]
    %v1956 = vld [vmem:[%s7 + $0x3c] sm:$0xf]
    %v1957 = vld [vmem:[%s7 + $0x40] sm:$0xf]
    %v1958 = vld [vmem:[%s7 + $0x44] sm:$0xf]
    %v1959 = vld [vmem:[%s7 + $0x48] sm:$0xf]
    %v1960 = vld [vmem:[%s7 + $0x4c] sm:$0xf]
    %v1961 = vld [vmem:[%s7 + $0x50] sm:$0xf]
    %v1962 = vld [vmem:[%s7 + $0x54] sm:$0xf]
    %v1963 = vld [vmem:[%s7 + $0x58] sm:$0xf]
    %v1964 = vld [vmem:[%s7 + $0x5c] sm:$0xf]
    %v1965 = vld [vmem:[%s7 + $0x60] sm:$0xf]
    %v1966 = vld [vmem:[%s7 + $0x64] sm:$0xf]
    %v1967 = vld [vmem:[%s7 + $0x68] sm:$0xf]
    %v1968 = vld [vmem:[%s7 + $0x6c] sm:$0xf]
    %v1969 = vld [vmem:[%s7 + $0x70] sm:$0xf]
    %v1970 = vld [vmem:[%s7 + $0x74] sm:$0xf]
    %v1971 = vld [vmem:[%s7 + $0x78] sm:$0xf]
    %v1972 = vld [vmem:[%s7 + $0x7c] sm:$0xf]
    %v2005 = vunpack.c.l.b16 %v1941
    %v2006 = vunpack.c.l.b16 %v1942
    %v2007 = vunpack.c.l.b16 %v1943
    %v2008 = vunpack.c.l.b16 %v1944
    %v2009 = vunpack.c.l.b16 %v1945
    %v2010 = vunpack.c.l.b16 %v1946
    %v2011 = vunpack.c.l.b16 %v1947
    %v2012 = vunpack.c.l.b16 %v1948
    %v2013 = vunpack.c.l.b16 %v1949
    %v2014 = vunpack.c.l.b16 %v1950
    %v2015 = vunpack.c.l.b16 %v1951
    %v2016 = vunpack.c.l.b16 %v1952
    %v2017 = vunpack.c.l.b16 %v1953
    %v2018 = vunpack.c.l.b16 %v1954
    %v2019 = vunpack.c.l.b16 %v1955
    %v2020 = vunpack.c.l.b16 %v1956
    %v2021 = vunpack.c.l.b16 %v1957
    %v2022 = vunpack.c.l.b16 %v1958
    %v2023 = vunpack.c.l.b16 %v1959
    %v2024 = vunpack.c.l.b16 %v1960
    %v2025 = vunpack.c.l.b16 %v1961
    %v2026 = vunpack.c.l.b16 %v1962
    %v2027 = vunpack.c.l.b16 %v1963
    %v2028 = vunpack.c.l.b16 %v1964
    %v2029 = vunpack.c.l.b16 %v1965
    %v2030 = vunpack.c.l.b16 %v1966
    %v2031 = vunpack.c.l.b16 %v1967
    %v2032 = vunpack.c.l.b16 %v1968
    %v2033 = vunpack.c.l.b16 %v1969
    %v2034 = vunpack.c.l.b16 %v1970
    %v2035 = vunpack.c.l.b16 %v1971
    %v2036 = vunpack.c.l.b16 %v1972
    %v2037 = vpack.c.b16 %v2006, %v2005
    %v2038 = vpack.c.b16 %v2008, %v2007
    %v2039 = vpack.c.b16 %v2010, %v2009
    %v2040 = vpack.c.b16 %v2012, %v2011
    %v2041 = vpack.c.b16 %v2014, %v2013
    %v2042 = vpack.c.b16 %v2016, %v2015
    %v2043 = vpack.c.b16 %v2018, %v2017
    %v2044 = vpack.c.b16 %v2020, %v2019
    %v2045 = vpack.c.b16 %v2022, %v2021
    %v2046 = vpack.c.b16 %v2024, %v2023
    %v2047 = vpack.c.b16 %v2026, %v2025
    %v2048 = vpack.c.b16 %v2028, %v2027
    %v2049 = vpack.c.b16 %v2030, %v2029
    %v2050 = vpack.c.b16 %v2032, %v2031
    %v2051 = vpack.c.b16 %v2034, %v2033
    %v2052 = vpack.c.b16 %v2036, %v2035
    %2069 = vmatprep.subr.bf16.mxu0 0
    %2070 = vmatpush1.bf16.msra.mxu0 %v2044
    %2071 = vmatprep.subr.bf16.mxu0 0
    %2072 = vmatpush1.bf16.msra.mxu0 %v2043
    %2073 = vmatprep.subr.bf16.mxu0 0
    %2074 = vmatpush1.bf16.msra.mxu0 %v2042
    %2075 = vmatprep.subr.bf16.mxu0 0
    %2076 = vmatpush1.bf16.msra.mxu0 %v2041
    %2077 = vmatprep.subr.bf16.mxu0 0
    %2078 = vmatpush1.bf16.msra.mxu0 %v2040
    %2079 = vmatprep.subr.bf16.mxu0 0
    %2080 = vmatpush1.bf16.msra.mxu0 %v2039
    %2081 = vmatprep.subr.bf16.mxu0 0
    %2082 = vmatpush1.bf16.msra.mxu0 %v2038
    %2083 = vmatprep.subr.bf16.mxu0 0
    %2084 = vmatpush1.bf16.msra.mxu0 %v2037
    %2085 = vmatprep.subr.bf16.mxu0 0
    %2086 = vmatpush2.bf16.msra.mxu0 %v2052
    %2087 = vmatprep.subr.bf16.mxu0 0
    %2088 = vmatpush2.bf16.msra.mxu0 %v2051
    %2089 = vmatprep.subr.bf16.mxu0 0
    %2090 = vmatpush2.bf16.msra.mxu0 %v2050
    %2091 = vmatprep.subr.bf16.mxu0 0
    %2092 = vmatpush2.bf16.msra.mxu0 %v2049
    %2093 = vmatprep.subr.bf16.mxu0 0
    %2094 = vmatpush2.bf16.msra.mxu0 %v2048
    %2095 = vmatprep.subr.bf16.mxu0 0
    %2096 = vmatpush2.bf16.msra.mxu0 %v2047
    %2097 = vmatprep.subr.bf16.mxu0 0
    %2098 = vmatpush2.bf16.msra.mxu0 %v2046
    %2099 = vmatprep.subr.bf16.mxu0 0
    %2100 = vmatpush2.bf16.msra.mxu0 %v2045
    %2101 = vmatprep.mubr.bf16.mxu0 %v1940
    %2102 = vmatmul.mubr.bf16.gmra.mxu0 %v1939
    %v2103 = vpop.f32.mrf.mxu0
    %v2104 = vadd.f32 0.0, %v2103
    %v2105 = vpop.f32.mrf.mxu0
    %v2106 = vpop.f32.mrf.mxu0
    %v2107 = vadd.f32 0.0, %v2106
    %v2108 = vpop.f32.mrf.mxu0
    %2109 = vdwg.mxu0
    %v2110 = vadd.f32 %v1735, %v2104
    %v2111 = vadd.f32 %v1736, %v2107
    %2112 = vst.msk [vmem:[#allocation5] sm:$0xff] %vm56, %v2110
    %2113 = vst.msk [vmem:[#allocation5 + $0x8] sm:$0xff] %vm56, %v2111
    // Predicated region
    $region38: #{tpu_custom_call.1} parent=1 // pred_check
      _
    $region39: #{tpu_custom_call.1} parent=1 // pred_check_branch
      %2115 = sbr.rel (0) target = $region41
    $region40: #{tpu_custom_call.1} parent=1 // pred_region
      %s2117 = ssub.s32 256, 256
      %2118 = vsyncadd [#allocation4], %s2117
      %s2119 = sshll.u32 [#allocation5], 4
      %s2120 = int_to_ptr.vmem [resolvable:$true] %s2119
      %2125 = dma.vmem_to_hbm [thread:$0]  %s2120, 256, %s8, [#allocation4], 128, 128, 8
    $region41: #{tpu_custom_call.1} parent=1 // pred_fallthru
      _
    // Predicated region
    $region42: #{tpu_custom_call.1} parent=1 // pred_check
      _
    $region43: #{tpu_custom_call.1} parent=1 // pred_check_branch
      %2127 = sbr.rel (0) target = $region45
    $region44: #{tpu_custom_call.1} parent=1 // pred_region
      %2128 = dma.done [#allocation4], 256
    $region45: #{tpu_custom_call.1} parent=1 // pred_fallthru
      _
    %2129 = vsyncpa [#allocation3], 1
    %2130 = vsyncpa [#allocation4], 1

</llo_original>
